<compile_context>
chip_gen: v5e
topology: v5e:2x2
jax: 0.10.0
libtpu: 0.0.40
codegen_flags: <defaults>
</compile_context>

<pallas_src>
import functools

import jax
import jax.numpy as jnp
from jax.experimental import pallas as pl
from jax.experimental.pallas import tpu as pltpu


def _lane_roll(x, shift):
    """Static circular shift along the last (lane) axis.

    out[..., i] = x[..., (i - shift) mod L]   (same convention as jnp.roll).
    Implemented as a concat of two static lane slices (guaranteed Mosaic
    lowering; pltpu.roll is the XLU alternative).
    """
    L = x.shape[-1]
    s = shift % L
    if s == 0:
        return x
    return jnp.concatenate([x[..., L - s:], x[..., :L - s]], axis=-1)


def _net_kernel(x_ref, w1_ref, b1_ref, w2_ref, b2_ref, w3_ref, b3_ref,
                w4_ref, b4_ref, w7_ref, b7_ref, o_ref, *, H, W):
    """Fully fused Net forward for ONE batch element.

    Activations are kept in the transposed, lane-dense layout (C, H*W):
    spatial positions on the lane axis, channels on the sublane axis.

    x_ref  : (1, 1, H*W)      flattened single-channel input image
    wL_ref : (Cout, K*K*Cin)  im2col-flattened conv weights
    bL_ref : (Cout, 1)        biases
    o_ref  : (1, 1, H*W)      flattened single-channel output image
    """
    HW = H * W

    def im2col(a):
        """a: (Cin, H*W) -> (9*Cin, H*W) patch matrix for a 3x3 circular conv.

        Row order is (tap, cin) with tap = i*3 + j, matching the weight
        flattening in the wrapper. Tap (i, j) needs the source pixel
        ((h+i-1) mod H, (w+j-1) mod W). In the flattened H*W lane axis the
        circular H shift is an exact lane roll by (i-1)*W; the circular W
        shift is a lane roll by (j-1) plus a one-column fix-up select at the
        row boundary.
        """
        cin = a.shape[0]
        lane = jax.lax.broadcasted_iota(jnp.int32, (cin, HW), 1)
        col = lane % W
        is_last_col = col == (W - 1)
        is_first_col = col == 0

        rows = []
        for i in range(3):                      # dh = i - 1
            b = _lane_roll(a, -(i - 1) * W)     # exact circular H shift
            for j in range(3):                  # dw = j - 1
                if j == 1:                      # dw = 0
                    t = b
                elif j == 2:                    # dw = +1
                    t = jnp.where(is_last_col,
                                  _lane_roll(b, W - 1), _lane_roll(b, -1))
                else:                           # dw = -1
                    t = jnp.where(is_first_col,
                                  _lane_roll(b, -(W - 1)), _lane_roll(b, 1))
                rows.append(t)
        return jnp.concatenate(rows, axis=0)

    def rep_conv_tanh(a, w_ref, b_ref):
        # One MXU matmul per layer: (Cout, 9*Cin) @ (9*Cin, H*W).
        p = im2col(a)
        y = jnp.dot(w_ref[...], p, preferred_element_type=jnp.float32)
        return jnp.tanh(y + b_ref[...])

    a = x_ref[0]                                # (1, H*W), Cin = 1
    a = rep_conv_tanh(a, w1_ref, b1_ref)        # (12, H*W)
    a = rep_conv_tanh(a, w2_ref, b2_ref)
    a = rep_conv_tanh(a, w3_ref, b3_ref)
    a = rep_conv_tanh(a, w4_ref, b4_ref)

    # conv7: 1x1 conv, 12 -> 1, no activation; folded into the fused kernel
    # with a lane-dense (1, H*W) store.
    out = jnp.dot(w7_ref[...], a, preferred_element_type=jnp.float32)
    o_ref[0] = (out + b7_ref[...]).astype(o_ref.dtype)


def _flatten_conv_params(w, b):
    """(K, K, Cin, Cout), (Cout,) -> (Cout, K*K*Cin), (Cout, 1)."""
    K1, K2, Cin, Cout = w.shape
    wf = jnp.transpose(w, (3, 0, 1, 2)).reshape(Cout, K1 * K2 * Cin)
    return wf, b.reshape(Cout, 1)


@jax.jit
def net_forward(x_nchw, params):
    """Net.forward. Accepts NCHW input (PyTorch convention), returns NCHW."""
    N, Cin, H, W = x_nchw.shape
    assert Cin == 1, "Net.conv1 expects a single input channel"
    HW = H * W

    # NCHW with Cin == 1 -> lane-dense (N, 1, H*W); pure reshape, no transpose.
    x_flat = x_nchw.astype(jnp.float32).reshape(N, 1, HW)

    w1, b1 = _flatten_conv_params(*params["conv1"])
    w2, b2 = _flatten_conv_params(*params["conv2"])
    w3, b3 = _flatten_conv_params(*params["conv3"])
    w4, b4 = _flatten_conv_params(*params["conv4"])
    w7, b7 = _flatten_conv_params(*params["conv7"])

    def whole(arr):
        nd = arr.ndim
        return pl.BlockSpec(arr.shape, lambda n, _nd=nd: (0,) * _nd)

    kernel = functools.partial(_net_kernel, H=H, W=W)

    out_flat = pl.pallas_call(
        kernel,
        out_shape=jax.ShapeDtypeStruct((N, 1, HW), jnp.float32),
        grid=(N,),
        in_specs=[
            pl.BlockSpec((1, 1, HW), lambda n: (n, 0, 0)),
            whole(w1), whole(b1),
            whole(w2), whole(b2),
            whole(w3), whole(b3),
            whole(w4), whole(b4),
            whole(w7), whole(b7),
        ],
        out_specs=pl.BlockSpec((1, 1, HW), lambda n: (n, 0, 0)),
        compiler_params=pltpu.CompilerParams(
            dimension_semantics=("parallel",)),
    )(x_flat, w1, b1, w2, b2, w3, b3, w4, b4, w7, b7)

    return out_flat.reshape(N, 1, H, W)


def init_params(key, channels=12, conv_size=3):
    """Deterministic parameter init (shapes match the PyTorch module).

    Weights are stored as (K, K, Cin, Cout) — i.e. the transpose of PyTorch's
    (Cout, Cin, K, K) layout. Anyone loading trained PyTorch weights must
    permute them accordingly.
    """
    keys = jax.random.split(key, 10)

    def conv_w(k, kk, cin, cout):
        scale = 1.0 / jnp.sqrt(jnp.float32(cin * kk * kk))
        return jax.random.uniform(
            k, (kk, kk, cin, cout), jnp.float32, -scale, scale)

    def conv_b(k, cin, kk, cout):
        scale = 1.0 / jnp.sqrt(jnp.float32(cin * kk * kk))
        return jax.random.uniform(k, (cout,), jnp.float32, -scale, scale)

    params = {
        "conv1": (conv_w(keys[0], conv_size, 1, channels),
                  conv_b(keys[1], 1, conv_size, channels)),
        "conv2": (conv_w(keys[2], conv_size, channels, channels),
                  conv_b(keys[3], channels, conv_size, channels)),
        "conv3": (conv_w(keys[4], conv_size, channels, channels),
                  conv_b(keys[5], channels, conv_size, channels)),
        "conv4": (conv_w(keys[6], conv_size, channels, channels),
                  conv_b(keys[7], channels, conv_size, channels)),
        "conv7": (conv_w(keys[8], 1, channels, 1),
                  conv_b(keys[9], channels, 1, 1)),
    }
    return params


def _reference_forward(x_nchw, params):
    """Pure-XLA reference of the same module, for a numerical self-check."""
    dn = ("NCHW", "HWIO", "NCHW")

    def rep_conv(x, w, b):
        xp = jnp.pad(x, ((0, 0), (0, 0), (1, 1), (1, 1)), mode="wrap")
        y = jax.lax.conv_general_dilated(
            xp, w, window_strides=(1, 1), padding="VALID",
            dimension_numbers=dn, precision=jax.lax.Precision.HIGHEST)
        return y + b.reshape(1, -1, 1, 1)

    def conv1x1(x, w, b):
        y = jax.lax.conv_general_dilated(
            x, w, window_strides=(1, 1), padding="VALID",
            dimension_numbers=dn, precision=jax.lax.Precision.HIGHEST)
        return y + b.reshape(1, -1, 1, 1)

    y = jnp.tanh(rep_conv(x_nchw, *params["conv1"]))
    y = jnp.tanh(rep_conv(y, *params["conv2"]))
    y = jnp.tanh(rep_conv(y, *params["conv3"]))
    y = jnp.tanh(rep_conv(y, *params["conv4"]))
    return conv1x1(y, *params["conv7"])


if __name__ == "__main__":
    key = jax.random.PRNGKey(0)
    k_x, k_p = jax.random.split(key)

    # Small NCHW input consistent with Net: batch=2, 1 channel, 16x16 spatial.
    x = jax.random.normal(k_x, (2, 1, 16, 16), jnp.float32)
    params = init_params(k_p)

    out = net_forward(x, params)
    out = jax.block_until_ready(out)

    assert out.shape == (2, 1, 16, 16), out.shape
    assert out.dtype == jnp.float32

    # Numerical self-check of the fused Pallas kernel against plain XLA.
    ref = jax.block_until_ready(_reference_forward(x, params))
    max_err = float(jnp.max(jnp.abs(out - ref)))
    assert max_err < 5e-3, f"max abs error vs reference: {max_err}"

    print("KERNEL_OK")
</pallas_src>

<mosaic_0001>
module attributes {stable_mosaic.version = 11 : i64} {
  func.func @_net_kernel(%arg0: i32, %arg1: memref<1x1x256xf32, #tpu.memory_space<vmem>>, %arg2: memref<12x9xf32, #tpu.memory_space<vmem>>, %arg3: memref<12x1xf32, #tpu.memory_space<vmem>>, %arg4: memref<12x108xf32, #tpu.memory_space<vmem>>, %arg5: memref<12x1xf32, #tpu.memory_space<vmem>>, %arg6: memref<12x108xf32, #tpu.memory_space<vmem>>, %arg7: memref<12x1xf32, #tpu.memory_space<vmem>>, %arg8: memref<12x108xf32, #tpu.memory_space<vmem>>, %arg9: memref<12x1xf32, #tpu.memory_space<vmem>>, %arg10: memref<1x12xf32, #tpu.memory_space<vmem>>, %arg11: memref<1x1xf32, #tpu.memory_space<vmem>>, %arg12: memref<1x1x256xf32, #tpu.memory_space<vmem>>) attributes {dimension_semantics = [#tpu.dimension_semantics<parallel>], iteration_bounds = array<i64: 2>, scalar_prefetch = 0 : i64, scratch_operands = 0 : i64, tpu.core_type = #tpu.core_type<tc>, window_params = [{transform_indices = @transform_0, window_bounds = array<i64: 1, 1, 256>}, {pipeline_mode = #tpu.pipeline_mode<synchronous>, transform_indices = @transform_1, window_bounds = array<i64: 12, 9>}, {pipeline_mode = #tpu.pipeline_mode<synchronous>, transform_indices = @transform_2, window_bounds = array<i64: 12, 1>}, {pipeline_mode = #tpu.pipeline_mode<synchronous>, transform_indices = @transform_3, window_bounds = array<i64: 12, 108>}, {pipeline_mode = #tpu.pipeline_mode<synchronous>, transform_indices = @transform_4, window_bounds = array<i64: 12, 1>}, {pipeline_mode = #tpu.pipeline_mode<synchronous>, transform_indices = @transform_5, window_bounds = array<i64: 12, 108>}, {pipeline_mode = #tpu.pipeline_mode<synchronous>, transform_indices = @transform_6, window_bounds = array<i64: 12, 1>}, {pipeline_mode = #tpu.pipeline_mode<synchronous>, transform_indices = @transform_7, window_bounds = array<i64: 12, 108>}, {pipeline_mode = #tpu.pipeline_mode<synchronous>, transform_indices = @transform_8, window_bounds = array<i64: 12, 1>}, {pipeline_mode = #tpu.pipeline_mode<synchronous>, transform_indices = @transform_9, window_bounds = array<i64: 1, 12>}, {pipeline_mode = #tpu.pipeline_mode<synchronous>, transform_indices = @transform_10, window_bounds = array<i64: 1, 1>}, {transform_indices = @transform_11, window_bounds = array<i64: 1, 1, 256>}]} {
    %c0 = arith.constant 0 : index
    %c0_0 = arith.constant 0 : index
    %c0_1 = arith.constant 0 : index
    %0 = vector.load %arg1[%c0, %c0_0, %c0_1] : memref<1x1x256xf32, #tpu.memory_space<vmem>>, vector<1x1x256xf32>
    %1 = vector.shape_cast %0 : vector<1x1x256xf32> to vector<1x256xf32>
    %2 = tpu.iota {dimensions = array<i32: 1>} : vector<1x256xi32>
    %c16_i32 = arith.constant 16 : i32
    %c0_i32 = arith.constant 0 : i32
    %3 = arith.cmpi eq, %c16_i32, %c0_i32 : i32
    %c1_i32 = arith.constant 1 : i32
    %4 = arith.select %3, %c1_i32, %c16_i32 : i32
    %5 = vector.broadcast %4 : i32 to vector<1x256xi32>
    %6 = arith.remsi %2, %5 : vector<1x256xi32>
    %c0_i32_2 = arith.constant 0 : i32
    %7 = vector.broadcast %c0_i32_2 : i32 to vector<1x256xi32>
    %8 = arith.cmpi ne, %6, %7 : vector<1x256xi32>
    %c0_i32_3 = arith.constant 0 : i32
    %9 = vector.broadcast %c0_i32_3 : i32 to vector<1x256xi32>
    %10 = arith.cmpi slt, %6, %9 : vector<1x256xi32>
    %c0_i32_4 = arith.constant 0 : i32
    %11 = arith.cmpi slt, %4, %c0_i32_4 : i32
    %12 = vector.broadcast %11 : i1 to vector<1x256xi1>
    %13 = vector.broadcast %12 : vector<1x256xi1> to vector<1x256xi1>
    %14 = arith.xori %10, %13 : vector<1x256xi1>
    %15 = arith.andi %14, %8 : vector<1x256xi1>
    %16 = vector.broadcast %4 : i32 to vector<1x256xi32>
    %17 = arith.addi %6, %16 : vector<1x256xi32>
    %18 = arith.select %15, %17, %6 : vector<1x256xi1>, vector<1x256xi32>
    %c15_i32 = arith.constant 15 : i32
    %19 = vector.broadcast %c15_i32 : i32 to vector<1x256xi32>
    %20 = arith.cmpi eq, %18, %19 : vector<1x256xi32>
    %c0_i32_5 = arith.constant 0 : i32
    %21 = vector.broadcast %c0_i32_5 : i32 to vector<1x256xi32>
    %22 = arith.cmpi eq, %18, %21 : vector<1x256xi32>
    %23 = vector.extract_strided_slice %1 {offsets = [0, 240], sizes = [1, 16], strides = [1, 1]} : vector<1x256xf32> to vector<1x16xf32>
    %24 = vector.extract_strided_slice %1 {offsets = [0, 0], sizes = [1, 240], strides = [1, 1]} : vector<1x256xf32> to vector<1x240xf32>
    %25 = tpu.concatenate %23, %24 in 1 : vector<1x16xf32>, vector<1x240xf32> -> vector<1x256xf32>
    %26 = vector.extract_strided_slice %25 {offsets = [0, 15], sizes = [1, 241], strides = [1, 1]} : vector<1x256xf32> to vector<1x241xf32>
    %27 = vector.extract_strided_slice %25 {offsets = [0, 0], sizes = [1, 15], strides = [1, 1]} : vector<1x256xf32> to vector<1x15xf32>
    %28 = tpu.concatenate %26, %27 in 1 : vector<1x241xf32>, vector<1x15xf32> -> vector<1x256xf32>
    %29 = vector.extract_strided_slice %25 {offsets = [0, 255], sizes = [1, 1], strides = [1, 1]} : vector<1x256xf32> to vector<1x1xf32>
    %30 = vector.extract_strided_slice %25 {offsets = [0, 0], sizes = [1, 255], strides = [1, 1]} : vector<1x256xf32> to vector<1x255xf32>
    %31 = tpu.concatenate %29, %30 in 1 : vector<1x1xf32>, vector<1x255xf32> -> vector<1x256xf32>
    %32 = arith.select %22, %28, %31 : vector<1x256xi1>, vector<1x256xf32>
    %33 = vector.extract_strided_slice %25 {offsets = [0, 241], sizes = [1, 15], strides = [1, 1]} : vector<1x256xf32> to vector<1x15xf32>
    %34 = vector.extract_strided_slice %25 {offsets = [0, 0], sizes = [1, 241], strides = [1, 1]} : vector<1x256xf32> to vector<1x241xf32>
    %35 = tpu.concatenate %33, %34 in 1 : vector<1x15xf32>, vector<1x241xf32> -> vector<1x256xf32>
    %36 = vector.extract_strided_slice %25 {offsets = [0, 1], sizes = [1, 255], strides = [1, 1]} : vector<1x256xf32> to vector<1x255xf32>
    %37 = vector.extract_strided_slice %25 {offsets = [0, 0], sizes = [1, 1], strides = [1, 1]} : vector<1x256xf32> to vector<1x1xf32>
    %38 = tpu.concatenate %36, %37 in 1 : vector<1x255xf32>, vector<1x1xf32> -> vector<1x256xf32>
    %39 = arith.select %20, %35, %38 : vector<1x256xi1>, vector<1x256xf32>
    %40 = vector.extract_strided_slice %1 {offsets = [0, 15], sizes = [1, 241], strides = [1, 1]} : vector<1x256xf32> to vector<1x241xf32>
    %41 = vector.extract_strided_slice %1 {offsets = [0, 0], sizes = [1, 15], strides = [1, 1]} : vector<1x256xf32> to vector<1x15xf32>
    %42 = tpu.concatenate %40, %41 in 1 : vector<1x241xf32>, vector<1x15xf32> -> vector<1x256xf32>
    %43 = vector.extract_strided_slice %1 {offsets = [0, 255], sizes = [1, 1], strides = [1, 1]} : vector<1x256xf32> to vector<1x1xf32>
    %44 = vector.extract_strided_slice %1 {offsets = [0, 0], sizes = [1, 255], strides = [1, 1]} : vector<1x256xf32> to vector<1x255xf32>
    %45 = tpu.concatenate %43, %44 in 1 : vector<1x1xf32>, vector<1x255xf32> -> vector<1x256xf32>
    %46 = arith.select %22, %42, %45 : vector<1x256xi1>, vector<1x256xf32>
    %47 = vector.extract_strided_slice %1 {offsets = [0, 241], sizes = [1, 15], strides = [1, 1]} : vector<1x256xf32> to vector<1x15xf32>
    %48 = vector.extract_strided_slice %1 {offsets = [0, 0], sizes = [1, 241], strides = [1, 1]} : vector<1x256xf32> to vector<1x241xf32>
    %49 = tpu.concatenate %47, %48 in 1 : vector<1x15xf32>, vector<1x241xf32> -> vector<1x256xf32>
    %50 = vector.extract_strided_slice %1 {offsets = [0, 1], sizes = [1, 255], strides = [1, 1]} : vector<1x256xf32> to vector<1x255xf32>
    %51 = vector.extract_strided_slice %1 {offsets = [0, 0], sizes = [1, 1], strides = [1, 1]} : vector<1x256xf32> to vector<1x1xf32>
    %52 = tpu.concatenate %50, %51 in 1 : vector<1x255xf32>, vector<1x1xf32> -> vector<1x256xf32>
    %53 = arith.select %20, %49, %52 : vector<1x256xi1>, vector<1x256xf32>
    %54 = vector.extract_strided_slice %1 {offsets = [0, 16], sizes = [1, 240], strides = [1, 1]} : vector<1x256xf32> to vector<1x240xf32>
    %55 = vector.extract_strided_slice %1 {offsets = [0, 0], sizes = [1, 16], strides = [1, 1]} : vector<1x256xf32> to vector<1x16xf32>
    %56 = tpu.concatenate %54, %55 in 1 : vector<1x240xf32>, vector<1x16xf32> -> vector<1x256xf32>
    %57 = vector.extract_strided_slice %56 {offsets = [0, 15], sizes = [1, 241], strides = [1, 1]} : vector<1x256xf32> to vector<1x241xf32>
    %58 = vector.extract_strided_slice %56 {offsets = [0, 0], sizes = [1, 15], strides = [1, 1]} : vector<1x256xf32> to vector<1x15xf32>
    %59 = tpu.concatenate %57, %58 in 1 : vector<1x241xf32>, vector<1x15xf32> -> vector<1x256xf32>
    %60 = vector.extract_strided_slice %56 {offsets = [0, 255], sizes = [1, 1], strides = [1, 1]} : vector<1x256xf32> to vector<1x1xf32>
    %61 = vector.extract_strided_slice %56 {offsets = [0, 0], sizes = [1, 255], strides = [1, 1]} : vector<1x256xf32> to vector<1x255xf32>
    %62 = tpu.concatenate %60, %61 in 1 : vector<1x1xf32>, vector<1x255xf32> -> vector<1x256xf32>
    %63 = arith.select %22, %59, %62 : vector<1x256xi1>, vector<1x256xf32>
    %64 = vector.extract_strided_slice %56 {offsets = [0, 241], sizes = [1, 15], strides = [1, 1]} : vector<1x256xf32> to vector<1x15xf32>
    %65 = vector.extract_strided_slice %56 {offsets = [0, 0], sizes = [1, 241], strides = [1, 1]} : vector<1x256xf32> to vector<1x241xf32>
    %66 = tpu.concatenate %64, %65 in 1 : vector<1x15xf32>, vector<1x241xf32> -> vector<1x256xf32>
    %67 = vector.extract_strided_slice %56 {offsets = [0, 1], sizes = [1, 255], strides = [1, 1]} : vector<1x256xf32> to vector<1x255xf32>
    %68 = vector.extract_strided_slice %56 {offsets = [0, 0], sizes = [1, 1], strides = [1, 1]} : vector<1x256xf32> to vector<1x1xf32>
    %69 = tpu.concatenate %67, %68 in 1 : vector<1x255xf32>, vector<1x1xf32> -> vector<1x256xf32>
    %70 = arith.select %20, %66, %69 : vector<1x256xi1>, vector<1x256xf32>
    %71 = tpu.concatenate %32, %25, %39, %46, %1, %53, %63, %56, %70 in 0 : vector<1x256xf32>, vector<1x256xf32>, vector<1x256xf32>, vector<1x256xf32>, vector<1x256xf32>, vector<1x256xf32>, vector<1x256xf32>, vector<1x256xf32>, vector<1x256xf32> -> vector<9x256xf32>
    %c0_6 = arith.constant 0 : index
    %c0_7 = arith.constant 0 : index
    %72 = vector.load %arg2[%c0_6, %c0_7] : memref<12x9xf32, #tpu.memory_space<vmem>>, vector<12x9xf32>
    %cst = arith.constant dense<0.000000e+00> : vector<12x256xf32>
    %73 = tpu.matmul %72, %71, %cst {dimension_numbers = #tpu.dot_dimension_numbers<[1], [0], [0], [1], [0, 0, 1, 1], [], []>} : vector<12x9xf32>, vector<9x256xf32>, vector<12x256xf32> -> vector<12x256xf32>
    %c0_8 = arith.constant 0 : index
    %c0_9 = arith.constant 0 : index
    %74 = vector.load %arg3[%c0_8, %c0_9] : memref<12x1xf32, #tpu.memory_space<vmem>>, vector<12x1xf32>
    %75 = vector.broadcast %74 : vector<12x1xf32> to vector<12x256xf32>
    %76 = arith.addf %73, %75 : vector<12x256xf32>
    %77 = math.tanh %76 : vector<12x256xf32>
    %78 = tpu.iota {dimensions = array<i32: 1>} : vector<12x256xi32>
    %c16_i32_10 = arith.constant 16 : i32
    %c0_i32_11 = arith.constant 0 : i32
    %79 = arith.cmpi eq, %c16_i32_10, %c0_i32_11 : i32
    %c1_i32_12 = arith.constant 1 : i32
    %80 = arith.select %79, %c1_i32_12, %c16_i32_10 : i32
    %81 = vector.broadcast %80 : i32 to vector<12x256xi32>
    %82 = arith.remsi %78, %81 : vector<12x256xi32>
    %c0_i32_13 = arith.constant 0 : i32
    %83 = vector.broadcast %c0_i32_13 : i32 to vector<12x256xi32>
    %84 = arith.cmpi ne, %82, %83 : vector<12x256xi32>
    %c0_i32_14 = arith.constant 0 : i32
    %85 = vector.broadcast %c0_i32_14 : i32 to vector<12x256xi32>
    %86 = arith.cmpi slt, %82, %85 : vector<12x256xi32>
    %c0_i32_15 = arith.constant 0 : i32
    %87 = arith.cmpi slt, %80, %c0_i32_15 : i32
    %88 = vector.broadcast %87 : i1 to vector<12x256xi1>
    %89 = vector.broadcast %88 : vector<12x256xi1> to vector<12x256xi1>
    %90 = arith.xori %86, %89 : vector<12x256xi1>
    %91 = arith.andi %90, %84 : vector<12x256xi1>
    %92 = vector.broadcast %80 : i32 to vector<12x256xi32>
    %93 = arith.addi %82, %92 : vector<12x256xi32>
    %94 = arith.select %91, %93, %82 : vector<12x256xi1>, vector<12x256xi32>
    %c15_i32_16 = arith.constant 15 : i32
    %95 = vector.broadcast %c15_i32_16 : i32 to vector<12x256xi32>
    %96 = arith.cmpi eq, %94, %95 : vector<12x256xi32>
    %c0_i32_17 = arith.constant 0 : i32
    %97 = vector.broadcast %c0_i32_17 : i32 to vector<12x256xi32>
    %98 = arith.cmpi eq, %94, %97 : vector<12x256xi32>
    %99 = vector.extract_strided_slice %77 {offsets = [0, 240], sizes = [12, 16], strides = [1, 1]} : vector<12x256xf32> to vector<12x16xf32>
    %100 = vector.extract_strided_slice %77 {offsets = [0, 0], sizes = [12, 240], strides = [1, 1]} : vector<12x256xf32> to vector<12x240xf32>
    %101 = tpu.concatenate %99, %100 in 1 : vector<12x16xf32>, vector<12x240xf32> -> vector<12x256xf32>
    %102 = vector.extract_strided_slice %101 {offsets = [0, 15], sizes = [12, 241], strides = [1, 1]} : vector<12x256xf32> to vector<12x241xf32>
    %103 = vector.extract_strided_slice %101 {offsets = [0, 0], sizes = [12, 15], strides = [1, 1]} : vector<12x256xf32> to vector<12x15xf32>
    %104 = tpu.concatenate %102, %103 in 1 : vector<12x241xf32>, vector<12x15xf32> -> vector<12x256xf32>
    %105 = vector.extract_strided_slice %101 {offsets = [0, 255], sizes = [12, 1], strides = [1, 1]} : vector<12x256xf32> to vector<12x1xf32>
    %106 = vector.extract_strided_slice %101 {offsets = [0, 0], sizes = [12, 255], strides = [1, 1]} : vector<12x256xf32> to vector<12x255xf32>
    %107 = tpu.concatenate %105, %106 in 1 : vector<12x1xf32>, vector<12x255xf32> -> vector<12x256xf32>
    %108 = arith.select %98, %104, %107 : vector<12x256xi1>, vector<12x256xf32>
    %109 = vector.extract_strided_slice %101 {offsets = [0, 241], sizes = [12, 15], strides = [1, 1]} : vector<12x256xf32> to vector<12x15xf32>
    %110 = vector.extract_strided_slice %101 {offsets = [0, 0], sizes = [12, 241], strides = [1, 1]} : vector<12x256xf32> to vector<12x241xf32>
    %111 = tpu.concatenate %109, %110 in 1 : vector<12x15xf32>, vector<12x241xf32> -> vector<12x256xf32>
    %112 = vector.extract_strided_slice %101 {offsets = [0, 1], sizes = [12, 255], strides = [1, 1]} : vector<12x256xf32> to vector<12x255xf32>
    %113 = vector.extract_strided_slice %101 {offsets = [0, 0], sizes = [12, 1], strides = [1, 1]} : vector<12x256xf32> to vector<12x1xf32>
    %114 = tpu.concatenate %112, %113 in 1 : vector<12x255xf32>, vector<12x1xf32> -> vector<12x256xf32>
    %115 = arith.select %96, %111, %114 : vector<12x256xi1>, vector<12x256xf32>
    %116 = vector.extract_strided_slice %77 {offsets = [0, 15], sizes = [12, 241], strides = [1, 1]} : vector<12x256xf32> to vector<12x241xf32>
    %117 = vector.extract_strided_slice %77 {offsets = [0, 0], sizes = [12, 15], strides = [1, 1]} : vector<12x256xf32> to vector<12x15xf32>
    %118 = tpu.concatenate %116, %117 in 1 : vector<12x241xf32>, vector<12x15xf32> -> vector<12x256xf32>
    %119 = vector.extract_strided_slice %77 {offsets = [0, 255], sizes = [12, 1], strides = [1, 1]} : vector<12x256xf32> to vector<12x1xf32>
    %120 = vector.extract_strided_slice %77 {offsets = [0, 0], sizes = [12, 255], strides = [1, 1]} : vector<12x256xf32> to vector<12x255xf32>
    %121 = tpu.concatenate %119, %120 in 1 : vector<12x1xf32>, vector<12x255xf32> -> vector<12x256xf32>
    %122 = arith.select %98, %118, %121 : vector<12x256xi1>, vector<12x256xf32>
    %123 = vector.extract_strided_slice %77 {offsets = [0, 241], sizes = [12, 15], strides = [1, 1]} : vector<12x256xf32> to vector<12x15xf32>
    %124 = vector.extract_strided_slice %77 {offsets = [0, 0], sizes = [12, 241], strides = [1, 1]} : vector<12x256xf32> to vector<12x241xf32>
    %125 = tpu.concatenate %123, %124 in 1 : vector<12x15xf32>, vector<12x241xf32> -> vector<12x256xf32>
    %126 = vector.extract_strided_slice %77 {offsets = [0, 1], sizes = [12, 255], strides = [1, 1]} : vector<12x256xf32> to vector<12x255xf32>
    %127 = vector.extract_strided_slice %77 {offsets = [0, 0], sizes = [12, 1], strides = [1, 1]} : vector<12x256xf32> to vector<12x1xf32>
    %128 = tpu.concatenate %126, %127 in 1 : vector<12x255xf32>, vector<12x1xf32> -> vector<12x256xf32>
    %129 = arith.select %96, %125, %128 : vector<12x256xi1>, vector<12x256xf32>
    %130 = vector.extract_strided_slice %77 {offsets = [0, 16], sizes = [12, 240], strides = [1, 1]} : vector<12x256xf32> to vector<12x240xf32>
    %131 = vector.extract_strided_slice %77 {offsets = [0, 0], sizes = [12, 16], strides = [1, 1]} : vector<12x256xf32> to vector<12x16xf32>
    %132 = tpu.concatenate %130, %131 in 1 : vector<12x240xf32>, vector<12x16xf32> -> vector<12x256xf32>
    %133 = vector.extract_strided_slice %132 {offsets = [0, 15], sizes = [12, 241], strides = [1, 1]} : vector<12x256xf32> to vector<12x241xf32>
    %134 = vector.extract_strided_slice %132 {offsets = [0, 0], sizes = [12, 15], strides = [1, 1]} : vector<12x256xf32> to vector<12x15xf32>
    %135 = tpu.concatenate %133, %134 in 1 : vector<12x241xf32>, vector<12x15xf32> -> vector<12x256xf32>
    %136 = vector.extract_strided_slice %132 {offsets = [0, 255], sizes = [12, 1], strides = [1, 1]} : vector<12x256xf32> to vector<12x1xf32>
    %137 = vector.extract_strided_slice %132 {offsets = [0, 0], sizes = [12, 255], strides = [1, 1]} : vector<12x256xf32> to vector<12x255xf32>
    %138 = tpu.concatenate %136, %137 in 1 : vector<12x1xf32>, vector<12x255xf32> -> vector<12x256xf32>
    %139 = arith.select %98, %135, %138 : vector<12x256xi1>, vector<12x256xf32>
    %140 = vector.extract_strided_slice %132 {offsets = [0, 241], sizes = [12, 15], strides = [1, 1]} : vector<12x256xf32> to vector<12x15xf32>
    %141 = vector.extract_strided_slice %132 {offsets = [0, 0], sizes = [12, 241], strides = [1, 1]} : vector<12x256xf32> to vector<12x241xf32>
    %142 = tpu.concatenate %140, %141 in 1 : vector<12x15xf32>, vector<12x241xf32> -> vector<12x256xf32>
    %143 = vector.extract_strided_slice %132 {offsets = [0, 1], sizes = [12, 255], strides = [1, 1]} : vector<12x256xf32> to vector<12x255xf32>
    %144 = vector.extract_strided_slice %132 {offsets = [0, 0], sizes = [12, 1], strides = [1, 1]} : vector<12x256xf32> to vector<12x1xf32>
    %145 = tpu.concatenate %143, %144 in 1 : vector<12x255xf32>, vector<12x1xf32> -> vector<12x256xf32>
    %146 = arith.select %96, %142, %145 : vector<12x256xi1>, vector<12x256xf32>
    %147 = tpu.concatenate %108, %101, %115, %122, %77, %129, %139, %132, %146 in 0 : vector<12x256xf32>, vector<12x256xf32>, vector<12x256xf32>, vector<12x256xf32>, vector<12x256xf32>, vector<12x256xf32>, vector<12x256xf32>, vector<12x256xf32>, vector<12x256xf32> -> vector<108x256xf32>
    %c0_18 = arith.constant 0 : index
    %c0_19 = arith.constant 0 : index
    %148 = vector.load %arg4[%c0_18, %c0_19] : memref<12x108xf32, #tpu.memory_space<vmem>>, vector<12x108xf32>
    %cst_20 = arith.constant dense<0.000000e+00> : vector<12x256xf32>
    %149 = tpu.matmul %148, %147, %cst_20 {dimension_numbers = #tpu.dot_dimension_numbers<[1], [0], [0], [1], [0, 0, 1, 1], [], []>} : vector<12x108xf32>, vector<108x256xf32>, vector<12x256xf32> -> vector<12x256xf32>
    %c0_21 = arith.constant 0 : index
    %c0_22 = arith.constant 0 : index
    %150 = vector.load %arg5[%c0_21, %c0_22] : memref<12x1xf32, #tpu.memory_space<vmem>>, vector<12x1xf32>
    %151 = vector.broadcast %150 : vector<12x1xf32> to vector<12x256xf32>
    %152 = arith.addf %149, %151 : vector<12x256xf32>
    %153 = math.tanh %152 : vector<12x256xf32>
    %154 = tpu.iota {dimensions = array<i32: 1>} : vector<12x256xi32>
    %c16_i32_23 = arith.constant 16 : i32
    %c0_i32_24 = arith.constant 0 : i32
    %155 = arith.cmpi eq, %c16_i32_23, %c0_i32_24 : i32
    %c1_i32_25 = arith.constant 1 : i32
    %156 = arith.select %155, %c1_i32_25, %c16_i32_23 : i32
    %157 = vector.broadcast %156 : i32 to vector<12x256xi32>
    %158 = arith.remsi %154, %157 : vector<12x256xi32>
    %c0_i32_26 = arith.constant 0 : i32
    %159 = vector.broadcast %c0_i32_26 : i32 to vector<12x256xi32>
    %160 = arith.cmpi ne, %158, %159 : vector<12x256xi32>
    %c0_i32_27 = arith.constant 0 : i32
    %161 = vector.broadcast %c0_i32_27 : i32 to vector<12x256xi32>
    %162 = arith.cmpi slt, %158, %161 : vector<12x256xi32>
    %c0_i32_28 = arith.constant 0 : i32
    %163 = arith.cmpi slt, %156, %c0_i32_28 : i32
    %164 = vector.broadcast %163 : i1 to vector<12x256xi1>
    %165 = vector.broadcast %164 : vector<12x256xi1> to vector<12x256xi1>
    %166 = arith.xori %162, %165 : vector<12x256xi1>
    %167 = arith.andi %166, %160 : vector<12x256xi1>
    %168 = vector.broadcast %156 : i32 to vector<12x256xi32>
    %169 = arith.addi %158, %168 : vector<12x256xi32>
    %170 = arith.select %167, %169, %158 : vector<12x256xi1>, vector<12x256xi32>
    %c15_i32_29 = arith.constant 15 : i32
    %171 = vector.broadcast %c15_i32_29 : i32 to vector<12x256xi32>
    %172 = arith.cmpi eq, %170, %171 : vector<12x256xi32>
    %c0_i32_30 = arith.constant 0 : i32
    %173 = vector.broadcast %c0_i32_30 : i32 to vector<12x256xi32>
    %174 = arith.cmpi eq, %170, %173 : vector<12x256xi32>
    %175 = vector.extract_strided_slice %153 {offsets = [0, 240], sizes = [12, 16], strides = [1, 1]} : vector<12x256xf32> to vector<12x16xf32>
    %176 = vector.extract_strided_slice %153 {offsets = [0, 0], sizes = [12, 240], strides = [1, 1]} : vector<12x256xf32> to vector<12x240xf32>
    %177 = tpu.concatenate %175, %176 in 1 : vector<12x16xf32>, vector<12x240xf32> -> vector<12x256xf32>
    %178 = vector.extract_strided_slice %177 {offsets = [0, 15], sizes = [12, 241], strides = [1, 1]} : vector<12x256xf32> to vector<12x241xf32>
    %179 = vector.extract_strided_slice %177 {offsets = [0, 0], sizes = [12, 15], strides = [1, 1]} : vector<12x256xf32> to vector<12x15xf32>
    %180 = tpu.concatenate %178, %179 in 1 : vector<12x241xf32>, vector<12x15xf32> -> vector<12x256xf32>
    %181 = vector.extract_strided_slice %177 {offsets = [0, 255], sizes = [12, 1], strides = [1, 1]} : vector<12x256xf32> to vector<12x1xf32>
    %182 = vector.extract_strided_slice %177 {offsets = [0, 0], sizes = [12, 255], strides = [1, 1]} : vector<12x256xf32> to vector<12x255xf32>
    %183 = tpu.concatenate %181, %182 in 1 : vector<12x1xf32>, vector<12x255xf32> -> vector<12x256xf32>
    %184 = arith.select %174, %180, %183 : vector<12x256xi1>, vector<12x256xf32>
    %185 = vector.extract_strided_slice %177 {offsets = [0, 241], sizes = [12, 15], strides = [1, 1]} : vector<12x256xf32> to vector<12x15xf32>
    %186 = vector.extract_strided_slice %177 {offsets = [0, 0], sizes = [12, 241], strides = [1, 1]} : vector<12x256xf32> to vector<12x241xf32>
    %187 = tpu.concatenate %185, %186 in 1 : vector<12x15xf32>, vector<12x241xf32> -> vector<12x256xf32>
    %188 = vector.extract_strided_slice %177 {offsets = [0, 1], sizes = [12, 255], strides = [1, 1]} : vector<12x256xf32> to vector<12x255xf32>
    %189 = vector.extract_strided_slice %177 {offsets = [0, 0], sizes = [12, 1], strides = [1, 1]} : vector<12x256xf32> to vector<12x1xf32>
    %190 = tpu.concatenate %188, %189 in 1 : vector<12x255xf32>, vector<12x1xf32> -> vector<12x256xf32>
    %191 = arith.select %172, %187, %190 : vector<12x256xi1>, vector<12x256xf32>
    %192 = vector.extract_strided_slice %153 {offsets = [0, 15], sizes = [12, 241], strides = [1, 1]} : vector<12x256xf32> to vector<12x241xf32>
    %193 = vector.extract_strided_slice %153 {offsets = [0, 0], sizes = [12, 15], strides = [1, 1]} : vector<12x256xf32> to vector<12x15xf32>
    %194 = tpu.concatenate %192, %193 in 1 : vector<12x241xf32>, vector<12x15xf32> -> vector<12x256xf32>
    %195 = vector.extract_strided_slice %153 {offsets = [0, 255], sizes = [12, 1], strides = [1, 1]} : vector<12x256xf32> to vector<12x1xf32>
    %196 = vector.extract_strided_slice %153 {offsets = [0, 0], sizes = [12, 255], strides = [1, 1]} : vector<12x256xf32> to vector<12x255xf32>
    %197 = tpu.concatenate %195, %196 in 1 : vector<12x1xf32>, vector<12x255xf32> -> vector<12x256xf32>
    %198 = arith.select %174, %194, %197 : vector<12x256xi1>, vector<12x256xf32>
    %199 = vector.extract_strided_slice %153 {offsets = [0, 241], sizes = [12, 15], strides = [1, 1]} : vector<12x256xf32> to vector<12x15xf32>
    %200 = vector.extract_strided_slice %153 {offsets = [0, 0], sizes = [12, 241], strides = [1, 1]} : vector<12x256xf32> to vector<12x241xf32>
    %201 = tpu.concatenate %199, %200 in 1 : vector<12x15xf32>, vector<12x241xf32> -> vector<12x256xf32>
    %202 = vector.extract_strided_slice %153 {offsets = [0, 1], sizes = [12, 255], strides = [1, 1]} : vector<12x256xf32> to vector<12x255xf32>
    %203 = vector.extract_strided_slice %153 {offsets = [0, 0], sizes = [12, 1], strides = [1, 1]} : vector<12x256xf32> to vector<12x1xf32>
    %204 = tpu.concatenate %202, %203 in 1 : vector<12x255xf32>, vector<12x1xf32> -> vector<12x256xf32>
    %205 = arith.select %172, %201, %204 : vector<12x256xi1>, vector<12x256xf32>
    %206 = vector.extract_strided_slice %153 {offsets = [0, 16], sizes = [12, 240], strides = [1, 1]} : vector<12x256xf32> to vector<12x240xf32>
    %207 = vector.extract_strided_slice %153 {offsets = [0, 0], sizes = [12, 16], strides = [1, 1]} : vector<12x256xf32> to vector<12x16xf32>
    %208 = tpu.concatenate %206, %207 in 1 : vector<12x240xf32>, vector<12x16xf32> -> vector<12x256xf32>
    %209 = vector.extract_strided_slice %208 {offsets = [0, 15], sizes = [12, 241], strides = [1, 1]} : vector<12x256xf32> to vector<12x241xf32>
    %210 = vector.extract_strided_slice %208 {offsets = [0, 0], sizes = [12, 15], strides = [1, 1]} : vector<12x256xf32> to vector<12x15xf32>
    %211 = tpu.concatenate %209, %210 in 1 : vector<12x241xf32>, vector<12x15xf32> -> vector<12x256xf32>
    %212 = vector.extract_strided_slice %208 {offsets = [0, 255], sizes = [12, 1], strides = [1, 1]} : vector<12x256xf32> to vector<12x1xf32>
    %213 = vector.extract_strided_slice %208 {offsets = [0, 0], sizes = [12, 255], strides = [1, 1]} : vector<12x256xf32> to vector<12x255xf32>
    %214 = tpu.concatenate %212, %213 in 1 : vector<12x1xf32>, vector<12x255xf32> -> vector<12x256xf32>
    %215 = arith.select %174, %211, %214 : vector<12x256xi1>, vector<12x256xf32>
    %216 = vector.extract_strided_slice %208 {offsets = [0, 241], sizes = [12, 15], strides = [1, 1]} : vector<12x256xf32> to vector<12x15xf32>
    %217 = vector.extract_strided_slice %208 {offsets = [0, 0], sizes = [12, 241], strides = [1, 1]} : vector<12x256xf32> to vector<12x241xf32>
    %218 = tpu.concatenate %216, %217 in 1 : vector<12x15xf32>, vector<12x241xf32> -> vector<12x256xf32>
    %219 = vector.extract_strided_slice %208 {offsets = [0, 1], sizes = [12, 255], strides = [1, 1]} : vector<12x256xf32> to vector<12x255xf32>
    %220 = vector.extract_strided_slice %208 {offsets = [0, 0], sizes = [12, 1], strides = [1, 1]} : vector<12x256xf32> to vector<12x1xf32>
    %221 = tpu.concatenate %219, %220 in 1 : vector<12x255xf32>, vector<12x1xf32> -> vector<12x256xf32>
    %222 = arith.select %172, %218, %221 : vector<12x256xi1>, vector<12x256xf32>
    %223 = tpu.concatenate %184, %177, %191, %198, %153, %205, %215, %208, %222 in 0 : vector<12x256xf32>, vector<12x256xf32>, vector<12x256xf32>, vector<12x256xf32>, vector<12x256xf32>, vector<12x256xf32>, vector<12x256xf32>, vector<12x256xf32>, vector<12x256xf32> -> vector<108x256xf32>
    %c0_31 = arith.constant 0 : index
    %c0_32 = arith.constant 0 : index
    %224 = vector.load %arg6[%c0_31, %c0_32] : memref<12x108xf32, #tpu.memory_space<vmem>>, vector<12x108xf32>
    %cst_33 = arith.constant dense<0.000000e+00> : vector<12x256xf32>
    %225 = tpu.matmul %224, %223, %cst_33 {dimension_numbers = #tpu.dot_dimension_numbers<[1], [0], [0], [1], [0, 0, 1, 1], [], []>} : vector<12x108xf32>, vector<108x256xf32>, vector<12x256xf32> -> vector<12x256xf32>
    %c0_34 = arith.constant 0 : index
    %c0_35 = arith.constant 0 : index
    %226 = vector.load %arg7[%c0_34, %c0_35] : memref<12x1xf32, #tpu.memory_space<vmem>>, vector<12x1xf32>
    %227 = vector.broadcast %226 : vector<12x1xf32> to vector<12x256xf32>
    %228 = arith.addf %225, %227 : vector<12x256xf32>
    %229 = math.tanh %228 : vector<12x256xf32>
    %230 = tpu.iota {dimensions = array<i32: 1>} : vector<12x256xi32>
    %c16_i32_36 = arith.constant 16 : i32
    %c0_i32_37 = arith.constant 0 : i32
    %231 = arith.cmpi eq, %c16_i32_36, %c0_i32_37 : i32
    %c1_i32_38 = arith.constant 1 : i32
    %232 = arith.select %231, %c1_i32_38, %c16_i32_36 : i32
    %233 = vector.broadcast %232 : i32 to vector<12x256xi32>
    %234 = arith.remsi %230, %233 : vector<12x256xi32>
    %c0_i32_39 = arith.constant 0 : i32
    %235 = vector.broadcast %c0_i32_39 : i32 to vector<12x256xi32>
    %236 = arith.cmpi ne, %234, %235 : vector<12x256xi32>
    %c0_i32_40 = arith.constant 0 : i32
    %237 = vector.broadcast %c0_i32_40 : i32 to vector<12x256xi32>
    %238 = arith.cmpi slt, %234, %237 : vector<12x256xi32>
    %c0_i32_41 = arith.constant 0 : i32
    %239 = arith.cmpi slt, %232, %c0_i32_41 : i32
    %240 = vector.broadcast %239 : i1 to vector<12x256xi1>
    %241 = vector.broadcast %240 : vector<12x256xi1> to vector<12x256xi1>
    %242 = arith.xori %238, %241 : vector<12x256xi1>
    %243 = arith.andi %242, %236 : vector<12x256xi1>
    %244 = vector.broadcast %232 : i32 to vector<12x256xi32>
    %245 = arith.addi %234, %244 : vector<12x256xi32>
    %246 = arith.select %243, %245, %234 : vector<12x256xi1>, vector<12x256xi32>
    %c15_i32_42 = arith.constant 15 : i32
    %247 = vector.broadcast %c15_i32_42 : i32 to vector<12x256xi32>
    %248 = arith.cmpi eq, %246, %247 : vector<12x256xi32>
    %c0_i32_43 = arith.constant 0 : i32
    %249 = vector.broadcast %c0_i32_43 : i32 to vector<12x256xi32>
    %250 = arith.cmpi eq, %246, %249 : vector<12x256xi32>
    %251 = vector.extract_strided_slice %229 {offsets = [0, 240], sizes = [12, 16], strides = [1, 1]} : vector<12x256xf32> to vector<12x16xf32>
    %252 = vector.extract_strided_slice %229 {offsets = [0, 0], sizes = [12, 240], strides = [1, 1]} : vector<12x256xf32> to vector<12x240xf32>
    %253 = tpu.concatenate %251, %252 in 1 : vector<12x16xf32>, vector<12x240xf32> -> vector<12x256xf32>
    %254 = vector.extract_strided_slice %253 {offsets = [0, 15], sizes = [12, 241], strides = [1, 1]} : vector<12x256xf32> to vector<12x241xf32>
    %255 = vector.extract_strided_slice %253 {offsets = [0, 0], sizes = [12, 15], strides = [1, 1]} : vector<12x256xf32> to vector<12x15xf32>
    %256 = tpu.concatenate %254, %255 in 1 : vector<12x241xf32>, vector<12x15xf32> -> vector<12x256xf32>
    %257 = vector.extract_strided_slice %253 {offsets = [0, 255], sizes = [12, 1], strides = [1, 1]} : vector<12x256xf32> to vector<12x1xf32>
    %258 = vector.extract_strided_slice %253 {offsets = [0, 0], sizes = [12, 255], strides = [1, 1]} : vector<12x256xf32> to vector<12x255xf32>
    %259 = tpu.concatenate %257, %258 in 1 : vector<12x1xf32>, vector<12x255xf32> -> vector<12x256xf32>
    %260 = arith.select %250, %256, %259 : vector<12x256xi1>, vector<12x256xf32>
    %261 = vector.extract_strided_slice %253 {offsets = [0, 241], sizes = [12, 15], strides = [1, 1]} : vector<12x256xf32> to vector<12x15xf32>
    %262 = vector.extract_strided_slice %253 {offsets = [0, 0], sizes = [12, 241], strides = [1, 1]} : vector<12x256xf32> to vector<12x241xf32>
    %263 = tpu.concatenate %261, %262 in 1 : vector<12x15xf32>, vector<12x241xf32> -> vector<12x256xf32>
    %264 = vector.extract_strided_slice %253 {offsets = [0, 1], sizes = [12, 255], strides = [1, 1]} : vector<12x256xf32> to vector<12x255xf32>
    %265 = vector.extract_strided_slice %253 {offsets = [0, 0], sizes = [12, 1], strides = [1, 1]} : vector<12x256xf32> to vector<12x1xf32>
    %266 = tpu.concatenate %264, %265 in 1 : vector<12x255xf32>, vector<12x1xf32> -> vector<12x256xf32>
    %267 = arith.select %248, %263, %266 : vector<12x256xi1>, vector<12x256xf32>
    %268 = vector.extract_strided_slice %229 {offsets = [0, 15], sizes = [12, 241], strides = [1, 1]} : vector<12x256xf32> to vector<12x241xf32>
    %269 = vector.extract_strided_slice %229 {offsets = [0, 0], sizes = [12, 15], strides = [1, 1]} : vector<12x256xf32> to vector<12x15xf32>
    %270 = tpu.concatenate %268, %269 in 1 : vector<12x241xf32>, vector<12x15xf32> -> vector<12x256xf32>
    %271 = vector.extract_strided_slice %229 {offsets = [0, 255], sizes = [12, 1], strides = [1, 1]} : vector<12x256xf32> to vector<12x1xf32>
    %272 = vector.extract_strided_slice %229 {offsets = [0, 0], sizes = [12, 255], strides = [1, 1]} : vector<12x256xf32> to vector<12x255xf32>
    %273 = tpu.concatenate %271, %272 in 1 : vector<12x1xf32>, vector<12x255xf32> -> vector<12x256xf32>
    %274 = arith.select %250, %270, %273 : vector<12x256xi1>, vector<12x256xf32>
    %275 = vector.extract_strided_slice %229 {offsets = [0, 241], sizes = [12, 15], strides = [1, 1]} : vector<12x256xf32> to vector<12x15xf32>
    %276 = vector.extract_strided_slice %229 {offsets = [0, 0], sizes = [12, 241], strides = [1, 1]} : vector<12x256xf32> to vector<12x241xf32>
    %277 = tpu.concatenate %275, %276 in 1 : vector<12x15xf32>, vector<12x241xf32> -> vector<12x256xf32>
    %278 = vector.extract_strided_slice %229 {offsets = [0, 1], sizes = [12, 255], strides = [1, 1]} : vector<12x256xf32> to vector<12x255xf32>
    %279 = vector.extract_strided_slice %229 {offsets = [0, 0], sizes = [12, 1], strides = [1, 1]} : vector<12x256xf32> to vector<12x1xf32>
    %280 = tpu.concatenate %278, %279 in 1 : vector<12x255xf32>, vector<12x1xf32> -> vector<12x256xf32>
    %281 = arith.select %248, %277, %280 : vector<12x256xi1>, vector<12x256xf32>
    %282 = vector.extract_strided_slice %229 {offsets = [0, 16], sizes = [12, 240], strides = [1, 1]} : vector<12x256xf32> to vector<12x240xf32>
    %283 = vector.extract_strided_slice %229 {offsets = [0, 0], sizes = [12, 16], strides = [1, 1]} : vector<12x256xf32> to vector<12x16xf32>
    %284 = tpu.concatenate %282, %283 in 1 : vector<12x240xf32>, vector<12x16xf32> -> vector<12x256xf32>
    %285 = vector.extract_strided_slice %284 {offsets = [0, 15], sizes = [12, 241], strides = [1, 1]} : vector<12x256xf32> to vector<12x241xf32>
    %286 = vector.extract_strided_slice %284 {offsets = [0, 0], sizes = [12, 15], strides = [1, 1]} : vector<12x256xf32> to vector<12x15xf32>
    %287 = tpu.concatenate %285, %286 in 1 : vector<12x241xf32>, vector<12x15xf32> -> vector<12x256xf32>
    %288 = vector.extract_strided_slice %284 {offsets = [0, 255], sizes = [12, 1], strides = [1, 1]} : vector<12x256xf32> to vector<12x1xf32>
    %289 = vector.extract_strided_slice %284 {offsets = [0, 0], sizes = [12, 255], strides = [1, 1]} : vector<12x256xf32> to vector<12x255xf32>
    %290 = tpu.concatenate %288, %289 in 1 : vector<12x1xf32>, vector<12x255xf32> -> vector<12x256xf32>
    %291 = arith.select %250, %287, %290 : vector<12x256xi1>, vector<12x256xf32>
    %292 = vector.extract_strided_slice %284 {offsets = [0, 241], sizes = [12, 15], strides = [1, 1]} : vector<12x256xf32> to vector<12x15xf32>
    %293 = vector.extract_strided_slice %284 {offsets = [0, 0], sizes = [12, 241], strides = [1, 1]} : vector<12x256xf32> to vector<12x241xf32>
    %294 = tpu.concatenate %292, %293 in 1 : vector<12x15xf32>, vector<12x241xf32> -> vector<12x256xf32>
    %295 = vector.extract_strided_slice %284 {offsets = [0, 1], sizes = [12, 255], strides = [1, 1]} : vector<12x256xf32> to vector<12x255xf32>
    %296 = vector.extract_strided_slice %284 {offsets = [0, 0], sizes = [12, 1], strides = [1, 1]} : vector<12x256xf32> to vector<12x1xf32>
    %297 = tpu.concatenate %295, %296 in 1 : vector<12x255xf32>, vector<12x1xf32> -> vector<12x256xf32>
    %298 = arith.select %248, %294, %297 : vector<12x256xi1>, vector<12x256xf32>
    %299 = tpu.concatenate %260, %253, %267, %274, %229, %281, %291, %284, %298 in 0 : vector<12x256xf32>, vector<12x256xf32>, vector<12x256xf32>, vector<12x256xf32>, vector<12x256xf32>, vector<12x256xf32>, vector<12x256xf32>, vector<12x256xf32>, vector<12x256xf32> -> vector<108x256xf32>
    %c0_44 = arith.constant 0 : index
    %c0_45 = arith.constant 0 : index
    %300 = vector.load %arg8[%c0_44, %c0_45] : memref<12x108xf32, #tpu.memory_space<vmem>>, vector<12x108xf32>
    %cst_46 = arith.constant dense<0.000000e+00> : vector<12x256xf32>
    %301 = tpu.matmul %300, %299, %cst_46 {dimension_numbers = #tpu.dot_dimension_numbers<[1], [0], [0], [1], [0, 0, 1, 1], [], []>} : vector<12x108xf32>, vector<108x256xf32>, vector<12x256xf32> -> vector<12x256xf32>
    %c0_47 = arith.constant 0 : index
    %c0_48 = arith.constant 0 : index
    %302 = vector.load %arg9[%c0_47, %c0_48] : memref<12x1xf32, #tpu.memory_space<vmem>>, vector<12x1xf32>
    %303 = vector.broadcast %302 : vector<12x1xf32> to vector<12x256xf32>
    %304 = arith.addf %301, %303 : vector<12x256xf32>
    %305 = math.tanh %304 : vector<12x256xf32>
    %c0_49 = arith.constant 0 : index
    %c0_50 = arith.constant 0 : index
    %306 = vector.load %arg10[%c0_49, %c0_50] : memref<1x12xf32, #tpu.memory_space<vmem>>, vector<1x12xf32>
    %cst_51 = arith.constant dense<0.000000e+00> : vector<1x256xf32>
    %307 = tpu.matmul %306, %305, %cst_51 {dimension_numbers = #tpu.dot_dimension_numbers<[1], [0], [0], [1], [0, 0, 1, 1], [], []>} : vector<1x12xf32>, vector<12x256xf32>, vector<1x256xf32> -> vector<1x256xf32>
    %c0_52 = arith.constant 0 : index
    %c0_53 = arith.constant 0 : index
    %308 = vector.load %arg11[%c0_52, %c0_53] : memref<1x1xf32, #tpu.memory_space<vmem>>, vector<1x1xf32>
    %309 = vector.broadcast %308 : vector<1x1xf32> to vector<1x256xf32>
    %310 = arith.addf %307, %309 : vector<1x256xf32>
    %c0_54 = arith.constant 0 : index
    %c0_55 = arith.constant 0 : index
    %c0_56 = arith.constant 0 : index
    %311 = vector.load %arg12[%c0_54, %c0_55, %c0_56] : memref<1x1x256xf32, #tpu.memory_space<vmem>>, vector<1x1x256xf32>
    %312 = vector.shape_cast %311 : vector<1x1x256xf32> to vector<1x256xf32>
    %313 = vector.shape_cast %310 : vector<1x256xf32> to vector<1x1x256xf32>
    tpu.vector_store %arg12[%c0_54, %c0_55, %c0_56], %313 {strides = array<i32>} : memref<1x1x256xf32, #tpu.memory_space<vmem>>, vector<1x1x256xf32>,
    return
  }
  func.func @transform_0(%arg0: i32) -> (i32, i32, i32) {
    %c0_i32 = arith.constant 0 : i32
    %c0_i32_0 = arith.constant 0 : i32
    %c0_i32_1 = arith.constant 0 : i32
    return %arg0, %c0_i32, %c0_i32_0 : i32, i32, i32
  }
  func.func @transform_1(%arg0: i32) -> (i32, i32) {
    %c0_i32 = arith.constant 0 : i32
    %c0_i32_0 = arith.constant 0 : i32
    %c0_i32_1 = arith.constant 0 : i32
    return %c0_i32, %c0_i32_0 : i32, i32
  }
  func.func @transform_2(%arg0: i32) -> (i32, i32) {
    %c0_i32 = arith.constant 0 : i32
    %c0_i32_0 = arith.constant 0 : i32
    %c0_i32_1 = arith.constant 0 : i32
    return %c0_i32, %c0_i32_0 : i32, i32
  }
  func.func @transform_3(%arg0: i32) -> (i32, i32) {
    %c0_i32 = arith.constant 0 : i32
    %c0_i32_0 = arith.constant 0 : i32
    %c0_i32_1 = arith.constant 0 : i32
    return %c0_i32, %c0_i32_0 : i32, i32
  }
  func.func @transform_4(%arg0: i32) -> (i32, i32) {
    %c0_i32 = arith.constant 0 : i32
    %c0_i32_0 = arith.constant 0 : i32
    %c0_i32_1 = arith.constant 0 : i32
    return %c0_i32, %c0_i32_0 : i32, i32
  }
  func.func @transform_5(%arg0: i32) -> (i32, i32) {
    %c0_i32 = arith.constant 0 : i32
    %c0_i32_0 = arith.constant 0 : i32
    %c0_i32_1 = arith.constant 0 : i32
    return %c0_i32, %c0_i32_0 : i32, i32
  }
  func.func @transform_6(%arg0: i32) -> (i32, i32) {
    %c0_i32 = arith.constant 0 : i32
    %c0_i32_0 = arith.constant 0 : i32
    %c0_i32_1 = arith.constant 0 : i32
    return %c0_i32, %c0_i32_0 : i32, i32
  }
  func.func @transform_7(%arg0: i32) -> (i32, i32) {
    %c0_i32 = arith.constant 0 : i32
    %c0_i32_0 = arith.constant 0 : i32
    %c0_i32_1 = arith.constant 0 : i32
    return %c0_i32, %c0_i32_0 : i32, i32
  }
  func.func @transform_8(%arg0: i32) -> (i32, i32) {
    %c0_i32 = arith.constant 0 : i32
    %c0_i32_0 = arith.constant 0 : i32
    %c0_i32_1 = arith.constant 0 : i32
    return %c0_i32, %c0_i32_0 : i32, i32
  }
  func.func @transform_9(%arg0: i32) -> (i32, i32) {
    %c0_i32 = arith.constant 0 : i32
    %c0_i32_0 = arith.constant 0 : i32
    %c0_i32_1 = arith.constant 0 : i32
    return %c0_i32, %c0_i32_0 : i32, i32
  }
  func.func @transform_10(%arg0: i32) -> (i32, i32) {
    %c0_i32 = arith.constant 0 : i32
    %c0_i32_0 = arith.constant 0 : i32
    %c0_i32_1 = arith.constant 0 : i32
    return %c0_i32, %c0_i32_0 : i32, i32
  }
  func.func @transform_11(%arg0: i32) -> (i32, i32, i32) {
    %c0_i32 = arith.constant 0 : i32
    %c0_i32_0 = arith.constant 0 : i32
    %c0_i32_1 = arith.constant 0 : i32
    return %arg0, %c0_i32, %c0_i32_0 : i32, i32, i32
  }
}

</mosaic_0001>

<llo_original>
// kernel: net_forward.1
$region0: #{net_forward.1}
  #allocation0 [shape = 'u32[]', space=smem, size = 0x4, offset = 0x4, fixed_abs, tag = 'smem constant byte address 0x4 - core index']
  #allocation1 [shape = 'u32[72,128]{1,0:T(1,128)}', space=vmem, size = 0x9000, scoped, tag = 'internal scratch']
  #allocation2 [shape = 'f32[1,1]{1,0:T(1,128)S(1)}', space=vmem, size = 0x200, scoped, tag = 'scoped memory for net_forward.1']
  %s0 = inlined_call_operand.vmem [shape: f32[2,1,256], index: 0, kind: input, shape index: {}]
  %s1 = inlined_call_operand.vmem [shape: f32[12,9], index: 1, kind: input, shape index: {}]
  %s2 = inlined_call_operand.vmem [shape: f32[12,1], index: 2, kind: input, shape index: {}]
  %s3 = inlined_call_operand.vmem [shape: f32[12,108], index: 3, kind: input, shape index: {}]
  %s4 = inlined_call_operand.vmem [shape: f32[12,1], index: 4, kind: input, shape index: {}]
  %s5 = inlined_call_operand.vmem [shape: f32[12,108], index: 5, kind: input, shape index: {}]
  %s6 = inlined_call_operand.vmem [shape: f32[12,1], index: 6, kind: input, shape index: {}]
  %s7 = inlined_call_operand.vmem [shape: f32[12,108], index: 7, kind: input, shape index: {}]
  %s8 = inlined_call_operand.vmem [shape: f32[12,1], index: 8, kind: input, shape index: {}]
  %s9 = inlined_call_operand.vmem [shape: f32[1,12], index: 9, kind: input, shape index: {}]
  %s10 = inlined_call_operand.<no memory space> [shape: f32[1,1], index: 10, kind: input, shape index: {}]
  %s11 = inlined_call_operand.vmem [shape: f32[2,1,256], index: 11, kind: output, shape index: {}]
  %s12 = sld [smem:[#allocation0]]
  $region77: #{net_forward.1} parent=0
    _
  %s14 = ssub.s32 1, %s12
  %s15 = scalar_select 0, %s14, %s12
  %v16 = vstv %s10
  %17 = vst [vmem:[#allocation2] sm:$0x1] %v16
  loop: start=0, step=1, limit=4
  $region2: #{net_forward.1} parent=0 // loop_pre_header
    _
  $region3: #{net_forward.1} parent=0 // loop_header
    %s19 = sphi 0, %s23
    %p20 = scmp.ge.s32.totalorder %s19, 4
    %s29 = sphi 0, %s31
    %s32 = sphi 0, %s29
    %s33 = sphi 0, %s32
    %s49 = sphi 0, %s33
    %s53 = sphi 0, %s53
    %s55 = sphi 0, %s53
    %s56 = sphi 0, %s55
    %s70 = sphi 0, %s56
    %s74 = sphi 0, %s74
    %s76 = sphi 0, %s74
    %s77 = sphi 0, %s76
    %s91 = sphi 0, %s77
    %s95 = sphi 0, %s95
    %s97 = sphi 0, %s95
    %s98 = sphi 0, %s97
    %s112 = sphi 0, %s98
    %s116 = sphi 0, %s116
    %s118 = sphi 0, %s116
    %s119 = sphi 0, %s118
    %s133 = sphi 0, %s119
    %s137 = sphi 0, %s137
    %s139 = sphi 0, %s137
    %s140 = sphi 0, %s139
    %s154 = sphi 0, %s140
    %s158 = sphi 0, %s158
    %s160 = sphi 0, %s158
    %s161 = sphi 0, %s160
    %s175 = sphi 0, %s161
    %s179 = sphi 0, %s179
    %s181 = sphi 0, %s179
    %s182 = sphi 0, %s181
    %s196 = sphi 0, %s182
    %s200 = sphi 0, %s200
    %s202 = sphi 0, %s200
    %s203 = sphi 0, %s202
    %s217 = sphi 0, %s203
    %s221 = sphi 0, %s221
    %s223 = sphi 0, %s221
    %s224 = sphi 0, %s223
    %s238 = sphi 0, %s224
    %s242 = sphi 0, %s242
    %s244 = sphi 0, %s242
    %s245 = sphi 0, %s244
    %s259 = sphi 0, %s245
    %s265 = sphi 0, %s267
    %s268 = sphi 0, %s265
    %s269 = sphi 0, %s268
    %s285 = sphi 0, %s269
  $region4: #{net_forward.1} parent=0 // loop_header_branch
    %22 = sbr.rel (%p20) target = $region8
  $region5: #{net_forward.1} parent=0 // loop_body
    %s24 = ssub.s32 %s19, 1
    %s25 = ssub.s32 %s19, 2
    %s26 = sadd.s32 %s19, 1
    %s27 = ssub.s32 %s19, %s26
    %p28 = scmp.eq.s32.totalorder %s27, 0
    %s30 = sadd.s32 %s29, 1
    %s31 = scalar_select %p28, %s29, %s30
    %p34 = pneg %p28
    %p35 = scmp.eq.s32.totalorder %s19, 1
    %p36 = por %p34, %p35
    %p37 = scmp.ne.s32.totalorder %s29, %s32
    %p38 = scmp.eq.s32.totalorder %s19, 0
    %p39 = por %p37, %p38
    %p40 = scmp.ne.s32.totalorder %s29, %s32
    %p41 = scmp.eq.s32.totalorder %s24, 1
    %p42 = por %p40, %p41
    %p43 = scmp.ne.s32.totalorder %s32, %s33
    %p44 = scmp.eq.s32.totalorder %s24, 0
    %p45 = por %p43, %p44
    %p46 = scmp.ne.s32.totalorder %s32, %s33
    %p47 = scmp.eq.s32.totalorder %s25, 1
    %p48 = por %p46, %p47
    %p50 = scmp.ne.s32.totalorder %s33, %s49
    %p51 = scmp.eq.s32.totalorder %s25, 0
    %p52 = por %p50, %p51
    %s54 = sadd.s32 %s53, 1
    %p57 = scmp.eq.s32.totalorder %s19, 1
    %p58 = scmp.ne.s32.totalorder %s53, %s55
    %p59 = scmp.eq.s32.totalorder %s19, 0
    %p60 = por %p58, %p59
    %p61 = scmp.ne.s32.totalorder %s53, %s55
    %p62 = scmp.eq.s32.totalorder %s24, 1
    %p63 = por %p61, %p62
    %p64 = scmp.ne.s32.totalorder %s55, %s56
    %p65 = scmp.eq.s32.totalorder %s24, 0
    %p66 = por %p64, %p65
    %p67 = scmp.ne.s32.totalorder %s55, %s56
    %p68 = scmp.eq.s32.totalorder %s25, 1
    %p69 = por %p67, %p68
    %p71 = scmp.ne.s32.totalorder %s56, %s70
    %p72 = scmp.eq.s32.totalorder %s25, 0
    %p73 = por %p71, %p72
    %s75 = sadd.s32 %s74, 1
    %p78 = scmp.eq.s32.totalorder %s19, 1
    %p79 = scmp.ne.s32.totalorder %s74, %s76
    %p80 = scmp.eq.s32.totalorder %s19, 0
    %p81 = por %p79, %p80
    %p82 = scmp.ne.s32.totalorder %s74, %s76
    %p83 = scmp.eq.s32.totalorder %s24, 1
    %p84 = por %p82, %p83
    %p85 = scmp.ne.s32.totalorder %s76, %s77
    %p86 = scmp.eq.s32.totalorder %s24, 0
    %p87 = por %p85, %p86
    %p88 = scmp.ne.s32.totalorder %s76, %s77
    %p89 = scmp.eq.s32.totalorder %s25, 1
    %p90 = por %p88, %p89
    %p92 = scmp.ne.s32.totalorder %s77, %s91
    %p93 = scmp.eq.s32.totalorder %s25, 0
    %p94 = por %p92, %p93
    %s96 = sadd.s32 %s95, 1
    %p99 = scmp.eq.s32.totalorder %s19, 1
    %p100 = scmp.ne.s32.totalorder %s95, %s97
    %p101 = scmp.eq.s32.totalorder %s19, 0
    %p102 = por %p100, %p101
    %p103 = scmp.ne.s32.totalorder %s95, %s97
    %p104 = scmp.eq.s32.totalorder %s24, 1
    %p105 = por %p103, %p104
    %p106 = scmp.ne.s32.totalorder %s97, %s98
    %p107 = scmp.eq.s32.totalorder %s24, 0
    %p108 = por %p106, %p107
    %p109 = scmp.ne.s32.totalorder %s97, %s98
    %p110 = scmp.eq.s32.totalorder %s25, 1
    %p111 = por %p109, %p110
    %p113 = scmp.ne.s32.totalorder %s98, %s112
    %p114 = scmp.eq.s32.totalorder %s25, 0
    %p115 = por %p113, %p114
    %s117 = sadd.s32 %s116, 1
    %p120 = scmp.eq.s32.totalorder %s19, 1
    %p121 = scmp.ne.s32.totalorder %s116, %s118
    %p122 = scmp.eq.s32.totalorder %s19, 0
    %p123 = por %p121, %p122
    %p124 = scmp.ne.s32.totalorder %s116, %s118
    %p125 = scmp.eq.s32.totalorder %s24, 1
    %p126 = por %p124, %p125
    %p127 = scmp.ne.s32.totalorder %s118, %s119
    %p128 = scmp.eq.s32.totalorder %s24, 0
    %p129 = por %p127, %p128
    %p130 = scmp.ne.s32.totalorder %s118, %s119
    %p131 = scmp.eq.s32.totalorder %s25, 1
    %p132 = por %p130, %p131
    %p134 = scmp.ne.s32.totalorder %s119, %s133
    %p135 = scmp.eq.s32.totalorder %s25, 0
    %p136 = por %p134, %p135
    %s138 = sadd.s32 %s137, 1
    %p141 = scmp.eq.s32.totalorder %s19, 1
    %p142 = scmp.ne.s32.totalorder %s137, %s139
    %p143 = scmp.eq.s32.totalorder %s19, 0
    %p144 = por %p142, %p143
    %p145 = scmp.ne.s32.totalorder %s137, %s139
    %p146 = scmp.eq.s32.totalorder %s24, 1
    %p147 = por %p145, %p146
    %p148 = scmp.ne.s32.totalorder %s139, %s140
    %p149 = scmp.eq.s32.totalorder %s24, 0
    %p150 = por %p148, %p149
    %p151 = scmp.ne.s32.totalorder %s139, %s140
    %p152 = scmp.eq.s32.totalorder %s25, 1
    %p153 = por %p151, %p152
    %p155 = scmp.ne.s32.totalorder %s140, %s154
    %p156 = scmp.eq.s32.totalorder %s25, 0
    %p157 = por %p155, %p156
    %s159 = sadd.s32 %s158, 1
    %p162 = scmp.eq.s32.totalorder %s19, 1
    %p163 = scmp.ne.s32.totalorder %s158, %s160
    %p164 = scmp.eq.s32.totalorder %s19, 0
    %p165 = por %p163, %p164
    %p166 = scmp.ne.s32.totalorder %s158, %s160
    %p167 = scmp.eq.s32.totalorder %s24, 1
    %p168 = por %p166, %p167
    %p169 = scmp.ne.s32.totalorder %s160, %s161
    %p170 = scmp.eq.s32.totalorder %s24, 0
    %p171 = por %p169, %p170
    %p172 = scmp.ne.s32.totalorder %s160, %s161
    %p173 = scmp.eq.s32.totalorder %s25, 1
    %p174 = por %p172, %p173
    %p176 = scmp.ne.s32.totalorder %s161, %s175
    %p177 = scmp.eq.s32.totalorder %s25, 0
    %p178 = por %p176, %p177
    %s180 = sadd.s32 %s179, 1
    %p183 = scmp.eq.s32.totalorder %s19, 1
    %p184 = scmp.ne.s32.totalorder %s179, %s181
    %p185 = scmp.eq.s32.totalorder %s19, 0
    %p186 = por %p184, %p185
    %p187 = scmp.ne.s32.totalorder %s179, %s181
    %p188 = scmp.eq.s32.totalorder %s24, 1
    %p189 = por %p187, %p188
    %p190 = scmp.ne.s32.totalorder %s181, %s182
    %p191 = scmp.eq.s32.totalorder %s24, 0
    %p192 = por %p190, %p191
    %p193 = scmp.ne.s32.totalorder %s181, %s182
    %p194 = scmp.eq.s32.totalorder %s25, 1
    %p195 = por %p193, %p194
    %p197 = scmp.ne.s32.totalorder %s182, %s196
    %p198 = scmp.eq.s32.totalorder %s25, 0
    %p199 = por %p197, %p198
    %s201 = sadd.s32 %s200, 1
    %p204 = scmp.eq.s32.totalorder %s19, 1
    %p205 = scmp.ne.s32.totalorder %s200, %s202
    %p206 = scmp.eq.s32.totalorder %s19, 0
    %p207 = por %p205, %p206
    %p208 = scmp.ne.s32.totalorder %s200, %s202
    %p209 = scmp.eq.s32.totalorder %s24, 1
    %p210 = por %p208, %p209
    %p211 = scmp.ne.s32.totalorder %s202, %s203
    %p212 = scmp.eq.s32.totalorder %s24, 0
    %p213 = por %p211, %p212
    %p214 = scmp.ne.s32.totalorder %s202, %s203
    %p215 = scmp.eq.s32.totalorder %s25, 1
    %p216 = por %p214, %p215
    %p218 = scmp.ne.s32.totalorder %s203, %s217
    %p219 = scmp.eq.s32.totalorder %s25, 0
    %p220 = por %p218, %p219
    %s222 = sadd.s32 %s221, 1
    %p225 = scmp.eq.s32.totalorder %s19, 1
    %p226 = scmp.ne.s32.totalorder %s221, %s223
    %p227 = scmp.eq.s32.totalorder %s19, 0
    %p228 = por %p226, %p227
    %p229 = scmp.ne.s32.totalorder %s221, %s223
    %p230 = scmp.eq.s32.totalorder %s24, 1
    %p231 = por %p229, %p230
    %p232 = scmp.ne.s32.totalorder %s223, %s224
    %p233 = scmp.eq.s32.totalorder %s24, 0
    %p234 = por %p232, %p233
    %p235 = scmp.ne.s32.totalorder %s223, %s224
    %p236 = scmp.eq.s32.totalorder %s25, 1
    %p237 = por %p235, %p236
    %p239 = scmp.ne.s32.totalorder %s224, %s238
    %p240 = scmp.eq.s32.totalorder %s25, 0
    %p241 = por %p239, %p240
    %s243 = sadd.s32 %s242, 1
    %p246 = scmp.eq.s32.totalorder %s19, 1
    %p247 = scmp.ne.s32.totalorder %s242, %s244
    %p248 = scmp.eq.s32.totalorder %s19, 0
    %p249 = por %p247, %p248
    %p250 = scmp.ne.s32.totalorder %s242, %s244
    %p251 = scmp.eq.s32.totalorder %s24, 1
    %p252 = por %p250, %p251
    %p253 = scmp.ne.s32.totalorder %s244, %s245
    %p254 = scmp.eq.s32.totalorder %s24, 0
    %p255 = por %p253, %p254
    %p256 = scmp.ne.s32.totalorder %s244, %s245
    %p257 = scmp.eq.s32.totalorder %s25, 1
    %p258 = por %p256, %p257
    %p260 = scmp.ne.s32.totalorder %s245, %s259
    %p261 = scmp.eq.s32.totalorder %s25, 0
    %p262 = por %p260, %p261
    %s263 = ssub.s32 %s19, %s26
    %p264 = scmp.eq.s32.totalorder %s263, 0
    %s266 = sadd.s32 %s265, 1
    %s267 = scalar_select %p264, %s265, %s266
    %p270 = pneg %p264
    %p271 = scmp.eq.s32.totalorder %s19, 1
    %p272 = por %p270, %p271
    %p273 = scmp.ne.s32.totalorder %s265, %s268
    %p274 = scmp.eq.s32.totalorder %s19, 0
    %p275 = por %p273, %p274
    %p276 = scmp.ne.s32.totalorder %s265, %s268
    %p277 = scmp.eq.s32.totalorder %s24, 1
    %p278 = por %p276, %p277
    %p279 = scmp.ne.s32.totalorder %s268, %s269
    %p280 = scmp.eq.s32.totalorder %s24, 0
    %p281 = por %p279, %p280
    %p282 = scmp.ne.s32.totalorder %s268, %s269
    %p283 = scmp.eq.s32.totalorder %s25, 1
    %p284 = por %p282, %p283
    %p286 = scmp.ne.s32.totalorder %s269, %s285
    %p287 = scmp.eq.s32.totalorder %s25, 0
    %p288 = por %p286, %p287
    %p289 = scmp.le.s32.totalorder 1, %s19
    %p290 = scmp.lt.s32.totalorder %s19, 3
    %p291 = pnand %p289, %p290
    %p292 = pneg %p291
    // Predicated region
    $region9: #{net_forward.1} parent=5 // pred_check
      _
    $region10: #{net_forward.1} parent=5 // pred_check_branch
      %294 = sbr.rel (%p291) target = $region12
    $region11: #{net_forward.1} parent=5 // pred_region
      %s295 = ssub.s32 %s19, 1
      // Predicated region
      $region13: #{net_forward.1} parent=11 // pred_check
        %p296 = pneg %p66
      $region14: #{net_forward.1} parent=11 // pred_check_branch
        %298 = sbr.rel (%p296) target = $region16
      $region15: #{net_forward.1} parent=11 // pred_region
        _
      $region16: #{net_forward.1} parent=11 // pred_fallthru
        _
      // Predicated region
      $region17: #{net_forward.1} parent=11 // pred_check
        %p299 = pneg %p87
      $region18: #{net_forward.1} parent=11 // pred_check_branch
        %301 = sbr.rel (%p299) target = $region20
      $region19: #{net_forward.1} parent=11 // pred_region
        _
      $region20: #{net_forward.1} parent=11 // pred_fallthru
        _
      // Predicated region
      $region21: #{net_forward.1} parent=11 // pred_check
        %p302 = pneg %p108
      $region22: #{net_forward.1} parent=11 // pred_check_branch
        %304 = sbr.rel (%p302) target = $region24
      $region23: #{net_forward.1} parent=11 // pred_region
        _
      $region24: #{net_forward.1} parent=11 // pred_fallthru
        _
      // Predicated region
      $region25: #{net_forward.1} parent=11 // pred_check
        %p305 = pneg %p129
      $region26: #{net_forward.1} parent=11 // pred_check_branch
        %307 = sbr.rel (%p305) target = $region28
      $region27: #{net_forward.1} parent=11 // pred_region
        _
      $region28: #{net_forward.1} parent=11 // pred_fallthru
        _
      // Predicated region
      $region29: #{net_forward.1} parent=11 // pred_check
        %p308 = pneg %p150
      $region30: #{net_forward.1} parent=11 // pred_check_branch
        %310 = sbr.rel (%p308) target = $region32
      $region31: #{net_forward.1} parent=11 // pred_region
        _
      $region32: #{net_forward.1} parent=11 // pred_fallthru
        _
      // Predicated region
      $region33: #{net_forward.1} parent=11 // pred_check
        %p311 = pneg %p171
      $region34: #{net_forward.1} parent=11 // pred_check_branch
        %313 = sbr.rel (%p311) target = $region36
      $region35: #{net_forward.1} parent=11 // pred_region
        _
      $region36: #{net_forward.1} parent=11 // pred_fallthru
        _
      // Predicated region
      $region37: #{net_forward.1} parent=11 // pred_check
        %p314 = pneg %p192
      $region38: #{net_forward.1} parent=11 // pred_check_branch
        %316 = sbr.rel (%p314) target = $region40
      $region39: #{net_forward.1} parent=11 // pred_region
        _
      $region40: #{net_forward.1} parent=11 // pred_fallthru
        _
      // Predicated region
      $region41: #{net_forward.1} parent=11 // pred_check
        %p317 = pneg %p213
      $region42: #{net_forward.1} parent=11 // pred_check_branch
        %319 = sbr.rel (%p317) target = $region44
      $region43: #{net_forward.1} parent=11 // pred_region
        _
      $region44: #{net_forward.1} parent=11 // pred_fallthru
        _
      // Predicated region
      $region45: #{net_forward.1} parent=11 // pred_check
        %p320 = pneg %p234
      $region46: #{net_forward.1} parent=11 // pred_check_branch
        %322 = sbr.rel (%p320) target = $region48
      $region47: #{net_forward.1} parent=11 // pred_region
        _
      $region48: #{net_forward.1} parent=11 // pred_fallthru
        _
      // Predicated region
      $region49: #{net_forward.1} parent=11 // pred_check
        %p323 = pneg %p255
      $region50: #{net_forward.1} parent=11 // pred_check_branch
        %325 = sbr.rel (%p323) target = $region52
      $region51: #{net_forward.1} parent=11 // pred_region
        _
      $region52: #{net_forward.1} parent=11 // pred_fallthru
        _
    $region12: #{net_forward.1} parent=5 // pred_fallthru
      _
    %p326 = scmp.lt.s32.totalorder %s19, 2
    // Predicated region
    $region53: #{net_forward.1} parent=5 // pred_check
      %p327 = pneg %p326
    $region54: #{net_forward.1} parent=5 // pred_check_branch
      %329 = sbr.rel (%p327) target = $region56
    $region55: #{net_forward.1} parent=5 // pred_region
      // Predicated region
      $region57: #{net_forward.1} parent=55 // pred_check
        %p330 = pneg %p39
      $region58: #{net_forward.1} parent=55 // pred_check_branch
        %332 = sbr.rel (%p330) target = $region60
      $region59: #{net_forward.1} parent=55 // pred_region
        %p333 = scmp.lt.s32.totalorder %s19, 1
        %s334 = scalar_select %p333, %s19, 1
        %s335 = smul.addr %s334, 2
        %s336 = scalar_lea.vmem %s0, %s335
      $region60: #{net_forward.1} parent=55 // pred_fallthru
        _
    $region56: #{net_forward.1} parent=5 // pred_fallthru
      _
    %p337 = scmp.le.s32.totalorder 1, %s19
    %p338 = scmp.lt.s32.totalorder %s19, 3
    %p339 = pnand %p337, %p338
    %p340 = pneg %p339
    // Predicated region
    $region61: #{net_forward.1} parent=5 // pred_check
      _
    $region62: #{net_forward.1} parent=5 // pred_check_branch
      %342 = sbr.rel (%p339) target = $region64
    $region63: #{net_forward.1} parent=5 // pred_region
      %s343 = ssub.s32 %s19, 1
      %p344 = scmp.lt.s32.totalorder %s24, 1
      %s345 = scalar_select %p344, %s24, 1
      %s346 = smul.addr %s345, 2
      %s347 = scalar_lea.vmem %s0, %s346
      %p348 = pneg %p45
      %p349 = pneg %p42
      %p350 = pneg %p66
      %p351 = pneg %p63
      %p352 = pneg %p87
      %p353 = pneg %p84
      %p354 = pneg %p108
      %p355 = pneg %p105
      %p356 = pneg %p129
      %p357 = pneg %p126
      %p358 = pneg %p150
      %p359 = pneg %p147
      %p360 = pneg %p171
      %p361 = pneg %p168
      %p362 = pneg %p192
      %p363 = pneg %p189
      %p364 = pneg %p213
      %p365 = pneg %p210
      %p366 = pneg %p234
      %p367 = pneg %p231
      %p368 = pneg %p255
      %p369 = pneg %p252
      %p370 = pneg %p281
      %p371 = pneg %p278
      %p372 = scmp.lt.s32.totalorder %s24, 1
      %s373 = scalar_select %p372, %s24, 1
      %s374 = smul.addr %s373, 2
      %s375 = scalar_lea.vmem %s11, %s374
      %p376 = scmp.lt.s32.totalorder %s24, 1
      %s377 = scalar_select %p376, %s24, 1
      %s378 = smul.addr %s377, 2
      %s379 = scalar_lea.vmem %s0, %s378
      %p380 = scmp.lt.s32.totalorder %s24, 1
      %s381 = scalar_select %p380, %s24, 1
      %s382 = smul.addr %s381, 2
      %s383 = scalar_lea.vmem %s11, %s382
      %v384 = vld [vmem:[%s379] sm:$0x3]
      %v385 = vlaneseq
      %v386 = vand.u32 %v385, 127
      %v387 = vadd.s32 %v386, 128
      %vm388 = vcmp.lt.s32.totalorder %v386, 0
      %v389 = vsub.s32 0, %v386
      %v390 = vsel %vm388, %v389, %v386
      %v391 = vshrl.u32 %v390, 4
      %v392 = vand.u32 %v390, 15
      %v393 = vsub.s32 0, %v392
      %v394 = vsel %vm388, %v393, %v392
      %vm395 = vcmp.lt.s32.totalorder %v387, 0
      %v396 = vsub.s32 0, %v387
      %v397 = vsel %vm395, %v396, %v387
      %v398 = vshrl.u32 %v397, 4
      %v399 = vand.u32 %v397, 15
      %v400 = vsub.s32 0, %v399
      %v401 = vsel %vm395, %v400, %v399
      %vm402 = vcmp.ne.s32.totalorder %v394, 0
      %vm403 = vcmp.ne.s32.totalorder %v401, 0
      %vm404 = vcmp.lt.s32.totalorder %v394, 0
      %vm405 = vcmp.lt.s32.totalorder %v401, 0
      %vm406 = vmand %vm404, %vm402
      %vm407 = vmand %vm405, %vm403
      %v408 = vadd.s32 %v394, 16
      %v409 = vadd.s32 %v401, 16
      %v410 = vsel %vm406, %v408, %v394
      %v411 = vsel %vm407, %v409, %v401
      %vm412 = vcmp.eq.s32.totalorder %v410, 15
      %vm413 = vcmp.eq.s32.totalorder %v411, 15
      %vm414 = vcmp.eq.s32.totalorder %v410, 0
      %vm415 = vcmp.eq.s32.totalorder %v411, 0
      %v417 = vperm.slane %v384, 1
      %418 = vrot.lane.b32.xlu0 %v417, 16
      %v419 = vpop.permute.xlu0 %418
      %v421 = vperm.slane %v384, 0
      %422 = vrot.lane.b32.xlu0 %v421, 16
      %v423 = vpop.permute.xlu0 %422
      %vm424 = vcmask 130048
      %v425 = vsel %vm424, %v423, %v419
      %v427 = vsel %vm424, %v419, %v423
      %429 = vrot.lane.b32.xlu0 %v427, 113
      %v430 = vpop.permute.xlu0 %429
      %431 = vrot.lane.b32.xlu0 %v425, 113
      %v432 = vpop.permute.xlu0 %431
      %vm433 = vcmask 924672
      %v434 = vsel %vm433, %v430, %v432
      %v438 = vsel %vm433, %v432, %v430
      %439 = vrot.lane.b32.xlu0 %v425, 1
      %v440 = vpop.permute.xlu0 %439
      %442 = vrot.lane.b32.xlu0 %v427, 1
      %v443 = vpop.permute.xlu0 %442
      %vm444 = vcmask 7168
      %v445 = vsel %vm444, %v443, %v440
      %v448 = vsel %vm444, %v440, %v443
      %v449 = vsel %vm414, %v434, %v448
      %v450 = vsel %vm415, %v438, %v445
      %451 = vrot.lane.b32.xlu0 %v425, 15
      %v452 = vpop.permute.xlu0 %451
      %454 = vrot.lane.b32.xlu0 %v427, 15
      %v455 = vpop.permute.xlu0 %454
      %vm456 = vcmask 121856
      %v457 = vsel %vm456, %v455, %v452
      %v460 = vsel %vm456, %v452, %v455
      %461 = vrot.lane.b32.xlu0 %v427, 127
      %v462 = vpop.permute.xlu0 %461
      %463 = vrot.lane.b32.xlu0 %v425, 127
      %v464 = vpop.permute.xlu0 %463
      %vm465 = vcmask 1039360
      %v466 = vsel %vm465, %v462, %v464
      %v470 = vsel %vm465, %v464, %v462
      %v471 = vsel %vm412, %v460, %v466
      %v472 = vsel %vm413, %v457, %v470
      %473 = vrot.lane.b32.xlu0 %v421, 113
      %v474 = vpop.permute.xlu0 %473
      %475 = vrot.lane.b32.xlu0 %v417, 113
      %v476 = vpop.permute.xlu0 %475
      %v477 = vsel %vm433, %v474, %v476
      %v481 = vsel %vm433, %v476, %v474
      %482 = vrot.lane.b32.xlu0 %v417, 1
      %v483 = vpop.permute.xlu0 %482
      %485 = vrot.lane.b32.xlu0 %v421, 1
      %v486 = vpop.permute.xlu0 %485
      %v487 = vsel %vm444, %v486, %v483
      %v490 = vsel %vm444, %v483, %v486
      %v491 = vsel %vm414, %v477, %v490
      %v492 = vsel %vm415, %v481, %v487
      %493 = vrot.lane.b32.xlu0 %v417, 15
      %v494 = vpop.permute.xlu0 %493
      %496 = vrot.lane.b32.xlu0 %v421, 15
      %v497 = vpop.permute.xlu0 %496
      %v498 = vsel %vm456, %v497, %v494
      %v501 = vsel %vm456, %v494, %v497
      %502 = vrot.lane.b32.xlu0 %v421, 127
      %v503 = vpop.permute.xlu0 %502
      %504 = vrot.lane.b32.xlu0 %v417, 127
      %v505 = vpop.permute.xlu0 %504
      %v506 = vsel %vm465, %v503, %v505
      %v510 = vsel %vm465, %v505, %v503
      %v511 = vsel %vm412, %v501, %v506
      %v512 = vsel %vm413, %v498, %v510
      %513 = vrot.lane.b32.xlu0 %v421, 112
      %v514 = vpop.permute.xlu0 %513
      %515 = vrot.lane.b32.xlu0 %v417, 112
      %v516 = vpop.permute.xlu0 %515
      %vm517 = vcmask 916480
      %v518 = vsel %vm517, %v514, %v516
      %v521 = vsel %vm517, %v516, %v514
      %523 = vrot.lane.b32.xlu0 %v518, 113
      %v524 = vpop.permute.xlu0 %523
      %525 = vrot.lane.b32.xlu0 %v521, 113
      %v526 = vpop.permute.xlu0 %525
      %v527 = vsel %vm433, %v524, %v526
      %v531 = vsel %vm433, %v526, %v524
      %532 = vrot.lane.b32.xlu0 %v521, 1
      %v533 = vpop.permute.xlu0 %532
      %535 = vrot.lane.b32.xlu0 %v518, 1
      %v536 = vpop.permute.xlu0 %535
      %v537 = vsel %vm444, %v536, %v533
      %v540 = vsel %vm444, %v533, %v536
      %v541 = vsel %vm414, %v527, %v540
      %v542 = vsel %vm415, %v531, %v537
      %543 = vrot.lane.b32.xlu0 %v521, 15
      %v544 = vpop.permute.xlu0 %543
      %546 = vrot.lane.b32.xlu0 %v518, 15
      %v547 = vpop.permute.xlu0 %546
      %v548 = vsel %vm456, %v547, %v544
      %v551 = vsel %vm456, %v544, %v547
      %552 = vrot.lane.b32.xlu0 %v518, 127
      %v553 = vpop.permute.xlu0 %552
      %554 = vrot.lane.b32.xlu0 %v521, 127
      %v555 = vpop.permute.xlu0 %554
      %v556 = vsel %vm465, %v553, %v555
      %v560 = vsel %vm465, %v555, %v553
      %v561 = vsel %vm412, %v551, %v556
      %v562 = vsel %vm413, %v548, %v560
      %v563 = vrot.slane %v427, 7
      %v564 = vrot.slane %v425, 7
      %v569 = vrot.slane %v471, 6
      %v570 = vrot.slane %v472, 6
      %v575 = vrot.slane %v491, 5
      %v576 = vrot.slane %v492, 5
      %v583 = vrot.slane %v511, 3
      %v584 = vrot.slane %v512, 3
      %v589 = vrot.slane %v541, 2
      %v590 = vrot.slane %v542, 2
      %v593 = vrot.slane %v518, 1
      %v594 = vrot.slane %v521, 1
      %vm597 = vcmask 1040384
      %v598 = vsel %vm597, %v449, %v563
      %v599 = vsel %vm597, %v450, %v564
      %vm600 = vcmask 1041408
      %v601 = vsel %vm600, %v598, %v569
      %v602 = vsel %vm600, %v599, %v570
      %vm603 = vcmask 1042432
      %v604 = vsel %vm603, %v601, %v575
      %v605 = vsel %vm603, %v602, %v576
      %vm606 = vcmask 1043456
      %v607 = vsel %vm606, %v604, %v421
      %v608 = vsel %vm606, %v605, %v417
      %vm609 = vcmask 1044480
      %v610 = vsel %vm609, %v607, %v583
      %v611 = vsel %vm609, %v608, %v584
      %vm612 = vcmask 1045504
      %v613 = vsel %vm612, %v610, %v589
      %v614 = vsel %vm612, %v611, %v590
      %vm615 = vcmask 1046528
      %v616 = vsel %vm615, %v613, %v593
      %v617 = vsel %vm615, %v614, %v594
      %v618 = vld [vmem:[%s1] sm:$0xff]
      %v619 = vld [vmem:[%s1 + $0x8] sm:$0xf]
      %v620 = vld [vmem:[%s2] sm:$0xff]
      %v621 = vld [vmem:[%s2 + $0x8] sm:$0xf]
      %623 = vset.pattern.permute.xlu0 0
      %624 = vperm.xlu0 %623, %v620
      %v625 = vpop.permute.xlu0 %624
      %628 = vset.pattern.permute.xlu0 0
      %629 = vperm.xlu0 %628, %v621
      %v630 = vpop.permute.xlu0 %629
      %vm632 = vcmask 72704
      %v634 = vsel %vm632, %v618, 0
      %v637 = vsel %vm632, %v619, 0
      %v640 = vsel %vm597, %v561, 0
      %v643 = vsel %vm597, %v562, 0
      %645 = vmatpush.msra.mxu0 0.0
      %646 = vmatpush.msra.mxu0 0.0
      %647 = vmatpush.msra.mxu0 0.0
      %648 = vmatpush.msra.mxu0 0.0
      %649 = vmatpush.msra.mxu0 0.0
      %650 = vmatpush.msra.mxu0 0.0
      %651 = vmatpush.msra.mxu0 0.0
      %652 = vmatpush.msra.mxu0 0.0
      %653 = vmatpush.msra.mxu0 0.0
      %654 = vmatpush.msra.mxu0 0.0
      %655 = vmatpush.msra.mxu0 0.0
      %656 = vmatpush.msra.mxu0 0.0
      %657 = vmatpush.msra.mxu0 0.0
      %658 = vmatpush.msra.mxu0 0.0
      %659 = vmatpush.msra.mxu0 %v640
      %660 = vmatpush.msra.mxu0 %v616
      %661 = vmatmul.f32.gmra.mxu0 %v634
      %v662 = vpop.f32.mrf.mxu0
      %v663 = vadd.f32 %v625, %v662
      %664 = vmatmul.f32.gmra.mxu0 %v637
      %v665 = vpop.f32.mrf.mxu0
      %v666 = vadd.f32 %v630, %v665
      %667 = vdwg.mxu0
      %668 = vmatpush.msra.mxu0 0.0
      %669 = vmatpush.msra.mxu0 0.0
      %670 = vmatpush.msra.mxu0 0.0
      %671 = vmatpush.msra.mxu0 0.0
      %672 = vmatpush.msra.mxu0 0.0
      %673 = vmatpush.msra.mxu0 0.0
      %674 = vmatpush.msra.mxu0 0.0
      %675 = vmatpush.msra.mxu0 0.0
      %676 = vmatpush.msra.mxu0 0.0
      %677 = vmatpush.msra.mxu0 0.0
      %678 = vmatpush.msra.mxu0 0.0
      %679 = vmatpush.msra.mxu0 0.0
      %680 = vmatpush.msra.mxu0 0.0
      %681 = vmatpush.msra.mxu0 0.0
      %682 = vmatpush.msra.mxu0 %v643
      %683 = vmatpush.msra.mxu0 %v617
      %684 = vmatmul.f32.gmra.mxu0 %v634
      %v685 = vpop.f32.mrf.mxu0
      %v686 = vadd.f32 %v625, %v685
      %687 = vmatmul.f32.gmra.mxu0 %v637
      %v688 = vpop.f32.mrf.mxu0
      %v689 = vadd.f32 %v630, %v688
      %690 = vdwg.mxu0
      %v691 = vtanh.pop %v663
      %v692 = vtanh.pop %v686
      %v693 = vtanh.pop %v666
      %v694 = vtanh.pop %v689
      %697 = vrot.lane.b32.xlu0 %v692, 16
      %v698 = vpop.permute.xlu0 %697
      %699 = vrot.lane.b32.xlu0 %v694, 16
      %v700 = vpop.permute.xlu0 %699
      %705 = vrot.lane.b32.xlu0 %v691, 16
      %v706 = vpop.permute.xlu0 %705
      %707 = vrot.lane.b32.xlu0 %v693, 16
      %v708 = vpop.permute.xlu0 %707
      %v709 = vsel %vm424, %v706, %v698
      %v710 = vsel %vm424, %v708, %v700
      %v713 = vsel %vm424, %v698, %v706
      %v714 = vsel %vm424, %v700, %v708
      %717 = vrot.lane.b32.xlu0 %v713, 113
      %v718 = vpop.permute.xlu0 %717
      %719 = vrot.lane.b32.xlu0 %v709, 113
      %v720 = vpop.permute.xlu0 %719
      %721 = vrot.lane.b32.xlu0 %v714, 113
      %v722 = vpop.permute.xlu0 %721
      %723 = vrot.lane.b32.xlu0 %v710, 113
      %v724 = vpop.permute.xlu0 %723
      %v725 = vsel %vm433, %v718, %v720
      %v726 = vsel %vm433, %v722, %v724
      %v733 = vsel %vm433, %v720, %v718
      %v734 = vsel %vm433, %v724, %v722
      %735 = vrot.lane.b32.xlu0 %v709, 1
      %v736 = vpop.permute.xlu0 %735
      %737 = vrot.lane.b32.xlu0 %v710, 1
      %v738 = vpop.permute.xlu0 %737
      %741 = vrot.lane.b32.xlu0 %v713, 1
      %v742 = vpop.permute.xlu0 %741
      %743 = vrot.lane.b32.xlu0 %v714, 1
      %v744 = vpop.permute.xlu0 %743
      %v745 = vsel %vm444, %v742, %v736
      %v746 = vsel %vm444, %v744, %v738
      %v751 = vsel %vm444, %v736, %v742
      %v752 = vsel %vm444, %v738, %v744
      %v753 = vsel %vm414, %v725, %v751
      %v754 = vsel %vm415, %v733, %v745
      %v755 = vsel %vm414, %v726, %v752
      %v756 = vsel %vm415, %v734, %v746
      %757 = vrot.lane.b32.xlu0 %v709, 15
      %v758 = vpop.permute.xlu0 %757
      %759 = vrot.lane.b32.xlu0 %v710, 15
      %v760 = vpop.permute.xlu0 %759
      %763 = vrot.lane.b32.xlu0 %v713, 15
      %v764 = vpop.permute.xlu0 %763
      %765 = vrot.lane.b32.xlu0 %v714, 15
      %v766 = vpop.permute.xlu0 %765
      %v767 = vsel %vm456, %v764, %v758
      %v768 = vsel %vm456, %v766, %v760
      %v773 = vsel %vm456, %v758, %v764
      %v774 = vsel %vm456, %v760, %v766
      %775 = vrot.lane.b32.xlu0 %v713, 127
      %v776 = vpop.permute.xlu0 %775
      %777 = vrot.lane.b32.xlu0 %v709, 127
      %v778 = vpop.permute.xlu0 %777
      %779 = vrot.lane.b32.xlu0 %v714, 127
      %v780 = vpop.permute.xlu0 %779
      %781 = vrot.lane.b32.xlu0 %v710, 127
      %v782 = vpop.permute.xlu0 %781
      %v783 = vsel %vm465, %v776, %v778
      %v784 = vsel %vm465, %v780, %v782
      %v791 = vsel %vm465, %v778, %v776
      %v792 = vsel %vm465, %v782, %v780
      %v793 = vsel %vm412, %v773, %v783
      %v794 = vsel %vm413, %v767, %v791
      %v795 = vsel %vm412, %v774, %v784
      %v796 = vsel %vm413, %v768, %v792
      %797 = vrot.lane.b32.xlu0 %v691, 113
      %v798 = vpop.permute.xlu0 %797
      %799 = vrot.lane.b32.xlu0 %v692, 113
      %v800 = vpop.permute.xlu0 %799
      %801 = vrot.lane.b32.xlu0 %v693, 113
      %v802 = vpop.permute.xlu0 %801
      %803 = vrot.lane.b32.xlu0 %v694, 113
      %v804 = vpop.permute.xlu0 %803
      %v805 = vsel %vm433, %v798, %v800
      %v806 = vsel %vm433, %v802, %v804
      %v813 = vsel %vm433, %v800, %v798
      %v814 = vsel %vm433, %v804, %v802
      %815 = vrot.lane.b32.xlu0 %v692, 1
      %v816 = vpop.permute.xlu0 %815
      %817 = vrot.lane.b32.xlu0 %v694, 1
      %v818 = vpop.permute.xlu0 %817
      %821 = vrot.lane.b32.xlu0 %v691, 1
      %v822 = vpop.permute.xlu0 %821
      %823 = vrot.lane.b32.xlu0 %v693, 1
      %v824 = vpop.permute.xlu0 %823
      %v825 = vsel %vm444, %v822, %v816
      %v826 = vsel %vm444, %v824, %v818
      %v831 = vsel %vm444, %v816, %v822
      %v832 = vsel %vm444, %v818, %v824
      %v833 = vsel %vm414, %v805, %v831
      %v834 = vsel %vm415, %v813, %v825
      %v835 = vsel %vm414, %v806, %v832
      %v836 = vsel %vm415, %v814, %v826
      %837 = vrot.lane.b32.xlu0 %v692, 15
      %v838 = vpop.permute.xlu0 %837
      %839 = vrot.lane.b32.xlu0 %v694, 15
      %v840 = vpop.permute.xlu0 %839
      %843 = vrot.lane.b32.xlu0 %v691, 15
      %v844 = vpop.permute.xlu0 %843
      %845 = vrot.lane.b32.xlu0 %v693, 15
      %v846 = vpop.permute.xlu0 %845
      %v847 = vsel %vm456, %v844, %v838
      %v848 = vsel %vm456, %v846, %v840
      %v853 = vsel %vm456, %v838, %v844
      %v854 = vsel %vm456, %v840, %v846
      %855 = vrot.lane.b32.xlu0 %v691, 127
      %v856 = vpop.permute.xlu0 %855
      %857 = vrot.lane.b32.xlu0 %v692, 127
      %v858 = vpop.permute.xlu0 %857
      %859 = vrot.lane.b32.xlu0 %v693, 127
      %v860 = vpop.permute.xlu0 %859
      %861 = vrot.lane.b32.xlu0 %v694, 127
      %v862 = vpop.permute.xlu0 %861
      %v863 = vsel %vm465, %v856, %v858
      %v864 = vsel %vm465, %v860, %v862
      %v871 = vsel %vm465, %v858, %v856
      %v872 = vsel %vm465, %v862, %v860
      %v873 = vsel %vm412, %v853, %v863
      %v874 = vsel %vm413, %v847, %v871
      %v875 = vsel %vm412, %v854, %v864
      %v876 = vsel %vm413, %v848, %v872
      %877 = vrot.lane.b32.xlu0 %v691, 112
      %v878 = vpop.permute.xlu0 %877
      %879 = vrot.lane.b32.xlu0 %v692, 112
      %v880 = vpop.permute.xlu0 %879
      %881 = vrot.lane.b32.xlu0 %v693, 112
      %v882 = vpop.permute.xlu0 %881
      %883 = vrot.lane.b32.xlu0 %v694, 112
      %v884 = vpop.permute.xlu0 %883
      %v885 = vsel %vm517, %v878, %v880
      %v886 = vsel %vm517, %v882, %v884
      %v891 = vsel %vm517, %v880, %v878
      %v892 = vsel %vm517, %v884, %v882
      %895 = vrot.lane.b32.xlu0 %v885, 113
      %v896 = vpop.permute.xlu0 %895
      %897 = vrot.lane.b32.xlu0 %v891, 113
      %v898 = vpop.permute.xlu0 %897
      %899 = vrot.lane.b32.xlu0 %v886, 113
      %v900 = vpop.permute.xlu0 %899
      %901 = vrot.lane.b32.xlu0 %v892, 113
      %v902 = vpop.permute.xlu0 %901
      %v903 = vsel %vm433, %v896, %v898
      %v904 = vsel %vm433, %v900, %v902
      %v911 = vsel %vm433, %v898, %v896
      %v912 = vsel %vm433, %v902, %v900
      %913 = vrot.lane.b32.xlu0 %v891, 1
      %v914 = vpop.permute.xlu0 %913
      %915 = vrot.lane.b32.xlu0 %v892, 1
      %v916 = vpop.permute.xlu0 %915
      %919 = vrot.lane.b32.xlu0 %v885, 1
      %v920 = vpop.permute.xlu0 %919
      %921 = vrot.lane.b32.xlu0 %v886, 1
      %v922 = vpop.permute.xlu0 %921
      %v923 = vsel %vm444, %v920, %v914
      %v924 = vsel %vm444, %v922, %v916
      %v929 = vsel %vm444, %v914, %v920
      %v930 = vsel %vm444, %v916, %v922
      %v931 = vsel %vm414, %v903, %v929
      %v932 = vsel %vm415, %v911, %v923
      %v933 = vsel %vm414, %v904, %v930
      %v934 = vsel %vm415, %v912, %v924
      %935 = vrot.lane.b32.xlu0 %v891, 15
      %v936 = vpop.permute.xlu0 %935
      %937 = vrot.lane.b32.xlu0 %v892, 15
      %v938 = vpop.permute.xlu0 %937
      %941 = vrot.lane.b32.xlu0 %v885, 15
      %v942 = vpop.permute.xlu0 %941
      %943 = vrot.lane.b32.xlu0 %v886, 15
      %v944 = vpop.permute.xlu0 %943
      %v945 = vsel %vm456, %v942, %v936
      %v946 = vsel %vm456, %v944, %v938
      %v951 = vsel %vm456, %v936, %v942
      %v952 = vsel %vm456, %v938, %v944
      %953 = vrot.lane.b32.xlu0 %v885, 127
      %v954 = vpop.permute.xlu0 %953
      %955 = vrot.lane.b32.xlu0 %v891, 127
      %v956 = vpop.permute.xlu0 %955
      %957 = vrot.lane.b32.xlu0 %v886, 127
      %v958 = vpop.permute.xlu0 %957
      %959 = vrot.lane.b32.xlu0 %v892, 127
      %v960 = vpop.permute.xlu0 %959
      %v961 = vsel %vm465, %v954, %v956
      %v962 = vsel %vm465, %v958, %v960
      %v969 = vsel %vm465, %v956, %v954
      %v970 = vsel %vm465, %v960, %v958
      %v971 = vsel %vm412, %v951, %v961
      %v972 = vsel %vm413, %v945, %v969
      %v973 = vsel %vm412, %v952, %v962
      %v974 = vsel %vm413, %v946, %v970
      %v975 = vrot.slane %v713, 4
      %v976 = vrot.slane %v709, 4
      %v977 = vrot.slane %v714, 4
      %v978 = vsel %vm606, %v975, %v977
      %v979 = vrot.slane %v710, 4
      %v980 = vsel %vm606, %v976, %v979
      %v989 = vrot.slane %v833, 4
      %v990 = vrot.slane %v834, 4
      %v991 = vrot.slane %v835, 4
      %v992 = vsel %vm606, %v989, %v991
      %v993 = vrot.slane %v836, 4
      %v994 = vsel %vm606, %v990, %v993
      %v1003 = vrot.slane %v873, 4
      %v1004 = vrot.slane %v874, 4
      %v1005 = vrot.slane %v875, 4
      %v1006 = vsel %vm606, %v1003, %v1005
      %v1007 = vrot.slane %v876, 4
      %v1008 = vsel %vm606, %v1004, %v1007
      %v1013 = vrot.slane %v885, 4
      %v1014 = vrot.slane %v891, 4
      %v1015 = vrot.slane %v886, 4
      %v1016 = vsel %vm606, %v1013, %v1015
      %v1017 = vrot.slane %v892, 4
      %v1018 = vsel %vm606, %v1014, %v1017
      %v1023 = vsel %vm606, %v755, %v975
      %v1024 = vsel %vm606, %v756, %v976
      %v1025 = vsel %vm606, %v795, %v989
      %v1026 = vsel %vm606, %v796, %v990
      %v1027 = vsel %vm606, %v693, %v1003
      %v1028 = vsel %vm606, %v694, %v1004
      %v1029 = vsel %vm606, %v933, %v1013
      %v1030 = vsel %vm606, %v934, %v1014
      %v1031 = vld [vmem:[%s3] sm:$0xff]
      %v1032 = vld [vmem:[%s3 + $0x8] sm:$0xf]
      %v1033 = vld [vmem:[%s4] sm:$0xff]
      %v1034 = vld [vmem:[%s4 + $0x8] sm:$0xf]
      %1036 = vset.pattern.permute.xlu0 0
      %1037 = vperm.xlu0 %1036, %v1033
      %v1038 = vpop.permute.xlu0 %1037
      %1041 = vset.pattern.permute.xlu0 0
      %1042 = vperm.xlu0 %1041, %v1034
      %v1043 = vpop.permute.xlu0 %1042
      %vm1045 = vcmask 883712
      %v1047 = vsel %vm1045, %v1031, 0
      %v1050 = vsel %vm1045, %v1032, 0
      %v1053 = vsel %vm606, %v973, 0
      %v1056 = vsel %vm606, %v974, 0
      %1058 = vmatpush.msra.mxu0 0.0
      %1059 = vmatpush.msra.mxu0 0.0
      %1060 = vmatpush.msra.mxu0 %v1053
      %1061 = vmatpush.msra.mxu0 %v971
      %1062 = vmatpush.msra.mxu0 %v1016
      %1063 = vmatpush.msra.mxu0 %v1029
      %1064 = vmatpush.msra.mxu0 %v931
      %1065 = vmatpush.msra.mxu0 %v1006
      %1066 = vmatpush.msra.mxu0 %v1027
      %1067 = vmatpush.msra.mxu0 %v691
      %1068 = vmatpush.msra.mxu0 %v992
      %1069 = vmatpush.msra.mxu0 %v1025
      %1070 = vmatpush.msra.mxu0 %v793
      %1071 = vmatpush.msra.mxu0 %v978
      %1072 = vmatpush.msra.mxu0 %v1023
      %1073 = vmatpush.msra.mxu0 %v753
      %1074 = vmatmul.f32.gmra.mxu0 %v1047
      %v1075 = vpop.f32.mrf.mxu0
      %v1076 = vadd.f32 %v1038, %v1075
      %1077 = vmatmul.f32.gmra.mxu0 %v1050
      %v1078 = vpop.f32.mrf.mxu0
      %v1079 = vadd.f32 %v1043, %v1078
      %1080 = vdwg.mxu0
      %1081 = vmatpush.msra.mxu0 0.0
      %1082 = vmatpush.msra.mxu0 0.0
      %1083 = vmatpush.msra.mxu0 %v1056
      %1084 = vmatpush.msra.mxu0 %v972
      %1085 = vmatpush.msra.mxu0 %v1018
      %1086 = vmatpush.msra.mxu0 %v1030
      %1087 = vmatpush.msra.mxu0 %v932
      %1088 = vmatpush.msra.mxu0 %v1008
      %1089 = vmatpush.msra.mxu0 %v1028
      %1090 = vmatpush.msra.mxu0 %v692
      %1091 = vmatpush.msra.mxu0 %v994
      %1092 = vmatpush.msra.mxu0 %v1026
      %1093 = vmatpush.msra.mxu0 %v794
      %1094 = vmatpush.msra.mxu0 %v980
      %1095 = vmatpush.msra.mxu0 %v1024
      %1096 = vmatpush.msra.mxu0 %v754
      %1097 = vmatmul.f32.gmra.mxu0 %v1047
      %v1098 = vpop.f32.mrf.mxu0
      %v1099 = vadd.f32 %v1038, %v1098
      %1100 = vmatmul.f32.gmra.mxu0 %v1050
      %v1101 = vpop.f32.mrf.mxu0
      %v1102 = vadd.f32 %v1043, %v1101
      %1103 = vdwg.mxu0
      %v1104 = vtanh.pop %v1076
      %v1105 = vtanh.pop %v1099
      %v1106 = vtanh.pop %v1079
      %v1107 = vtanh.pop %v1102
      %1110 = vrot.lane.b32.xlu0 %v1105, 16
      %v1111 = vpop.permute.xlu0 %1110
      %1112 = vrot.lane.b32.xlu0 %v1107, 16
      %v1113 = vpop.permute.xlu0 %1112
      %1118 = vrot.lane.b32.xlu0 %v1104, 16
      %v1119 = vpop.permute.xlu0 %1118
      %1120 = vrot.lane.b32.xlu0 %v1106, 16
      %v1121 = vpop.permute.xlu0 %1120
      %v1122 = vsel %vm424, %v1119, %v1111
      %v1123 = vsel %vm424, %v1121, %v1113
      %v1126 = vsel %vm424, %v1111, %v1119
      %v1127 = vsel %vm424, %v1113, %v1121
      %1130 = vrot.lane.b32.xlu0 %v1126, 113
      %v1131 = vpop.permute.xlu0 %1130
      %1132 = vrot.lane.b32.xlu0 %v1122, 113
      %v1133 = vpop.permute.xlu0 %1132
      %1134 = vrot.lane.b32.xlu0 %v1127, 113
      %v1135 = vpop.permute.xlu0 %1134
      %1136 = vrot.lane.b32.xlu0 %v1123, 113
      %v1137 = vpop.permute.xlu0 %1136
      %v1138 = vsel %vm433, %v1131, %v1133
      %v1139 = vsel %vm433, %v1135, %v1137
      %v1146 = vsel %vm433, %v1133, %v1131
      %v1147 = vsel %vm433, %v1137, %v1135
      %1148 = vrot.lane.b32.xlu0 %v1122, 1
      %v1149 = vpop.permute.xlu0 %1148
      %1150 = vrot.lane.b32.xlu0 %v1123, 1
      %v1151 = vpop.permute.xlu0 %1150
      %1154 = vrot.lane.b32.xlu0 %v1126, 1
      %v1155 = vpop.permute.xlu0 %1154
      %1156 = vrot.lane.b32.xlu0 %v1127, 1
      %v1157 = vpop.permute.xlu0 %1156
      %v1158 = vsel %vm444, %v1155, %v1149
      %v1159 = vsel %vm444, %v1157, %v1151
      %v1164 = vsel %vm444, %v1149, %v1155
      %v1165 = vsel %vm444, %v1151, %v1157
      %v1166 = vsel %vm414, %v1138, %v1164
      %v1167 = vsel %vm415, %v1146, %v1158
      %v1168 = vsel %vm414, %v1139, %v1165
      %v1169 = vsel %vm415, %v1147, %v1159
      %1170 = vrot.lane.b32.xlu0 %v1122, 15
      %v1171 = vpop.permute.xlu0 %1170
      %1172 = vrot.lane.b32.xlu0 %v1123, 15
      %v1173 = vpop.permute.xlu0 %1172
      %1176 = vrot.lane.b32.xlu0 %v1126, 15
      %v1177 = vpop.permute.xlu0 %1176
      %1178 = vrot.lane.b32.xlu0 %v1127, 15
      %v1179 = vpop.permute.xlu0 %1178
      %v1180 = vsel %vm456, %v1177, %v1171
      %v1181 = vsel %vm456, %v1179, %v1173
      %v1186 = vsel %vm456, %v1171, %v1177
      %v1187 = vsel %vm456, %v1173, %v1179
      %1188 = vrot.lane.b32.xlu0 %v1126, 127
      %v1189 = vpop.permute.xlu0 %1188
      %1190 = vrot.lane.b32.xlu0 %v1122, 127
      %v1191 = vpop.permute.xlu0 %1190
      %1192 = vrot.lane.b32.xlu0 %v1127, 127
      %v1193 = vpop.permute.xlu0 %1192
      %1194 = vrot.lane.b32.xlu0 %v1123, 127
      %v1195 = vpop.permute.xlu0 %1194
      %v1196 = vsel %vm465, %v1189, %v1191
      %v1197 = vsel %vm465, %v1193, %v1195
      %v1204 = vsel %vm465, %v1191, %v1189
      %v1205 = vsel %vm465, %v1195, %v1193
      %v1206 = vsel %vm412, %v1186, %v1196
      %v1207 = vsel %vm413, %v1180, %v1204
      %v1208 = vsel %vm412, %v1187, %v1197
      %v1209 = vsel %vm413, %v1181, %v1205
      %1210 = vrot.lane.b32.xlu0 %v1104, 113
      %v1211 = vpop.permute.xlu0 %1210
      %1212 = vrot.lane.b32.xlu0 %v1105, 113
      %v1213 = vpop.permute.xlu0 %1212
      %1214 = vrot.lane.b32.xlu0 %v1106, 113
      %v1215 = vpop.permute.xlu0 %1214
      %1216 = vrot.lane.b32.xlu0 %v1107, 113
      %v1217 = vpop.permute.xlu0 %1216
      %v1218 = vsel %vm433, %v1211, %v1213
      %v1219 = vsel %vm433, %v1215, %v1217
      %v1226 = vsel %vm433, %v1213, %v1211
      %v1227 = vsel %vm433, %v1217, %v1215
      %1228 = vrot.lane.b32.xlu0 %v1105, 1
      %v1229 = vpop.permute.xlu0 %1228
      %1230 = vrot.lane.b32.xlu0 %v1107, 1
      %v1231 = vpop.permute.xlu0 %1230
      %1234 = vrot.lane.b32.xlu0 %v1104, 1
      %v1235 = vpop.permute.xlu0 %1234
      %1236 = vrot.lane.b32.xlu0 %v1106, 1
      %v1237 = vpop.permute.xlu0 %1236
      %v1238 = vsel %vm444, %v1235, %v1229
      %v1239 = vsel %vm444, %v1237, %v1231
      %v1244 = vsel %vm444, %v1229, %v1235
      %v1245 = vsel %vm444, %v1231, %v1237
      %v1246 = vsel %vm414, %v1218, %v1244
      %v1247 = vsel %vm415, %v1226, %v1238
      %v1248 = vsel %vm414, %v1219, %v1245
      %v1249 = vsel %vm415, %v1227, %v1239
      %1250 = vrot.lane.b32.xlu0 %v1105, 15
      %v1251 = vpop.permute.xlu0 %1250
      %1252 = vrot.lane.b32.xlu0 %v1107, 15
      %v1253 = vpop.permute.xlu0 %1252
      %1256 = vrot.lane.b32.xlu0 %v1104, 15
      %v1257 = vpop.permute.xlu0 %1256
      %1258 = vrot.lane.b32.xlu0 %v1106, 15
      %v1259 = vpop.permute.xlu0 %1258
      %v1260 = vsel %vm456, %v1257, %v1251
      %v1261 = vsel %vm456, %v1259, %v1253
      %v1266 = vsel %vm456, %v1251, %v1257
      %v1267 = vsel %vm456, %v1253, %v1259
      %1268 = vrot.lane.b32.xlu0 %v1104, 127
      %v1269 = vpop.permute.xlu0 %1268
      %1270 = vrot.lane.b32.xlu0 %v1105, 127
      %v1271 = vpop.permute.xlu0 %1270
      %1272 = vrot.lane.b32.xlu0 %v1106, 127
      %v1273 = vpop.permute.xlu0 %1272
      %1274 = vrot.lane.b32.xlu0 %v1107, 127
      %v1275 = vpop.permute.xlu0 %1274
      %v1276 = vsel %vm465, %v1269, %v1271
      %v1277 = vsel %vm465, %v1273, %v1275
      %v1284 = vsel %vm465, %v1271, %v1269
      %v1285 = vsel %vm465, %v1275, %v1273
      %v1286 = vsel %vm412, %v1266, %v1276
      %v1287 = vsel %vm413, %v1260, %v1284
      %v1288 = vsel %vm412, %v1267, %v1277
      %v1289 = vsel %vm413, %v1261, %v1285
      %1290 = vrot.lane.b32.xlu0 %v1104, 112
      %v1291 = vpop.permute.xlu0 %1290
      %1292 = vrot.lane.b32.xlu0 %v1105, 112
      %v1293 = vpop.permute.xlu0 %1292
      %1294 = vrot.lane.b32.xlu0 %v1106, 112
      %v1295 = vpop.permute.xlu0 %1294
      %1296 = vrot.lane.b32.xlu0 %v1107, 112
      %v1297 = vpop.permute.xlu0 %1296
      %v1298 = vsel %vm517, %v1291, %v1293
      %v1299 = vsel %vm517, %v1295, %v1297
      %v1304 = vsel %vm517, %v1293, %v1291
      %v1305 = vsel %vm517, %v1297, %v1295
      %1308 = vrot.lane.b32.xlu0 %v1298, 113
      %v1309 = vpop.permute.xlu0 %1308
      %1310 = vrot.lane.b32.xlu0 %v1304, 113
      %v1311 = vpop.permute.xlu0 %1310
      %1312 = vrot.lane.b32.xlu0 %v1299, 113
      %v1313 = vpop.permute.xlu0 %1312
      %1314 = vrot.lane.b32.xlu0 %v1305, 113
      %v1315 = vpop.permute.xlu0 %1314
      %v1316 = vsel %vm433, %v1309, %v1311
      %v1317 = vsel %vm433, %v1313, %v1315
      %v1324 = vsel %vm433, %v1311, %v1309
      %v1325 = vsel %vm433, %v1315, %v1313
      %1326 = vrot.lane.b32.xlu0 %v1304, 1
      %v1327 = vpop.permute.xlu0 %1326
      %1328 = vrot.lane.b32.xlu0 %v1305, 1
      %v1329 = vpop.permute.xlu0 %1328
      %1332 = vrot.lane.b32.xlu0 %v1298, 1
      %v1333 = vpop.permute.xlu0 %1332
      %1334 = vrot.lane.b32.xlu0 %v1299, 1
      %v1335 = vpop.permute.xlu0 %1334
      %v1336 = vsel %vm444, %v1333, %v1327
      %v1337 = vsel %vm444, %v1335, %v1329
      %v1342 = vsel %vm444, %v1327, %v1333
      %v1343 = vsel %vm444, %v1329, %v1335
      %v1344 = vsel %vm414, %v1316, %v1342
      %v1345 = vsel %vm415, %v1324, %v1336
      %v1346 = vsel %vm414, %v1317, %v1343
      %v1347 = vsel %vm415, %v1325, %v1337
      %1348 = vrot.lane.b32.xlu0 %v1304, 15
      %v1349 = vpop.permute.xlu0 %1348
      %1350 = vrot.lane.b32.xlu0 %v1305, 15
      %v1351 = vpop.permute.xlu0 %1350
      %1354 = vrot.lane.b32.xlu0 %v1298, 15
      %v1355 = vpop.permute.xlu0 %1354
      %1356 = vrot.lane.b32.xlu0 %v1299, 15
      %v1357 = vpop.permute.xlu0 %1356
      %v1358 = vsel %vm456, %v1355, %v1349
      %v1359 = vsel %vm456, %v1357, %v1351
      %v1364 = vsel %vm456, %v1349, %v1355
      %v1365 = vsel %vm456, %v1351, %v1357
      %1366 = vrot.lane.b32.xlu0 %v1298, 127
      %v1367 = vpop.permute.xlu0 %1366
      %1368 = vrot.lane.b32.xlu0 %v1304, 127
      %v1369 = vpop.permute.xlu0 %1368
      %1370 = vrot.lane.b32.xlu0 %v1299, 127
      %v1371 = vpop.permute.xlu0 %1370
      %1372 = vrot.lane.b32.xlu0 %v1305, 127
      %v1373 = vpop.permute.xlu0 %1372
      %v1374 = vsel %vm465, %v1367, %v1369
      %v1375 = vsel %vm465, %v1371, %v1373
      %v1382 = vsel %vm465, %v1369, %v1367
      %v1383 = vsel %vm465, %v1373, %v1371
      %v1384 = vsel %vm412, %v1364, %v1374
      %v1385 = vsel %vm413, %v1358, %v1382
      %v1386 = vsel %vm412, %v1365, %v1375
      %v1387 = vsel %vm413, %v1359, %v1383
      %v1388 = vrot.slane %v1126, 4
      %v1389 = vrot.slane %v1122, 4
      %v1390 = vrot.slane %v1127, 4
      %v1391 = vsel %vm606, %v1388, %v1390
      %v1392 = vrot.slane %v1123, 4
      %v1393 = vsel %vm606, %v1389, %v1392
      %v1402 = vrot.slane %v1246, 4
      %v1403 = vrot.slane %v1247, 4
      %v1404 = vrot.slane %v1248, 4
      %v1405 = vsel %vm606, %v1402, %v1404
      %v1406 = vrot.slane %v1249, 4
      %v1407 = vsel %vm606, %v1403, %v1406
      %v1416 = vrot.slane %v1286, 4
      %v1417 = vrot.slane %v1287, 4
      %v1418 = vrot.slane %v1288, 4
      %v1419 = vsel %vm606, %v1416, %v1418
      %v1420 = vrot.slane %v1289, 4
      %v1421 = vsel %vm606, %v1417, %v1420
      %v1426 = vrot.slane %v1298, 4
      %v1427 = vrot.slane %v1304, 4
      %v1428 = vrot.slane %v1299, 4
      %v1429 = vsel %vm606, %v1426, %v1428
      %v1430 = vrot.slane %v1305, 4
      %v1431 = vsel %vm606, %v1427, %v1430
      %v1436 = vsel %vm606, %v1168, %v1388
      %v1437 = vsel %vm606, %v1169, %v1389
      %v1438 = vsel %vm606, %v1208, %v1402
      %v1439 = vsel %vm606, %v1209, %v1403
      %v1440 = vsel %vm606, %v1106, %v1416
      %v1441 = vsel %vm606, %v1107, %v1417
      %v1442 = vsel %vm606, %v1346, %v1426
      %v1443 = vsel %vm606, %v1347, %v1427
      %v1444 = vld [vmem:[%s5] sm:$0xff]
      %v1445 = vld [vmem:[%s5 + $0x8] sm:$0xf]
      %v1446 = vld [vmem:[%s6] sm:$0xff]
      %v1447 = vld [vmem:[%s6 + $0x8] sm:$0xf]
      %1449 = vset.pattern.permute.xlu0 0
      %1450 = vperm.xlu0 %1449, %v1446
      %v1451 = vpop.permute.xlu0 %1450
      %1454 = vset.pattern.permute.xlu0 0
      %1455 = vperm.xlu0 %1454, %v1447
      %v1456 = vpop.permute.xlu0 %1455
      %v1459 = vsel %vm1045, %v1444, 0
      %v1462 = vsel %vm1045, %v1445, 0
      %v1465 = vsel %vm606, %v1386, 0
      %v1468 = vsel %vm606, %v1387, 0
      %1470 = vmatpush.msra.mxu0 0.0
      %1471 = vmatpush.msra.mxu0 0.0
      %1472 = vmatpush.msra.mxu0 %v1465
      %1473 = vmatpush.msra.mxu0 %v1384
      %1474 = vmatpush.msra.mxu0 %v1429
      %1475 = vmatpush.msra.mxu0 %v1442
      %1476 = vmatpush.msra.mxu0 %v1344
      %1477 = vmatpush.msra.mxu0 %v1419
      %1478 = vmatpush.msra.mxu0 %v1440
      %1479 = vmatpush.msra.mxu0 %v1104
      %1480 = vmatpush.msra.mxu0 %v1405
      %1481 = vmatpush.msra.mxu0 %v1438
      %1482 = vmatpush.msra.mxu0 %v1206
      %1483 = vmatpush.msra.mxu0 %v1391
      %1484 = vmatpush.msra.mxu0 %v1436
      %1485 = vmatpush.msra.mxu0 %v1166
      %1486 = vmatmul.f32.gmra.mxu0 %v1459
      %v1487 = vpop.f32.mrf.mxu0
      %v1488 = vadd.f32 %v1451, %v1487
      %1489 = vmatmul.f32.gmra.mxu0 %v1462
      %v1490 = vpop.f32.mrf.mxu0
      %v1491 = vadd.f32 %v1456, %v1490
      %1492 = vdwg.mxu0
      %1493 = vmatpush.msra.mxu0 0.0
      %1494 = vmatpush.msra.mxu0 0.0
      %1495 = vmatpush.msra.mxu0 %v1468
      %1496 = vmatpush.msra.mxu0 %v1385
      %1497 = vmatpush.msra.mxu0 %v1431
      %1498 = vmatpush.msra.mxu0 %v1443
      %1499 = vmatpush.msra.mxu0 %v1345
      %1500 = vmatpush.msra.mxu0 %v1421
      %1501 = vmatpush.msra.mxu0 %v1441
      %1502 = vmatpush.msra.mxu0 %v1105
      %1503 = vmatpush.msra.mxu0 %v1407
      %1504 = vmatpush.msra.mxu0 %v1439
      %1505 = vmatpush.msra.mxu0 %v1207
      %1506 = vmatpush.msra.mxu0 %v1393
      %1507 = vmatpush.msra.mxu0 %v1437
      %1508 = vmatpush.msra.mxu0 %v1167
      %1509 = vmatmul.f32.gmra.mxu0 %v1459
      %v1510 = vpop.f32.mrf.mxu0
      %v1511 = vadd.f32 %v1451, %v1510
      %1512 = vmatmul.f32.gmra.mxu0 %v1462
      %v1513 = vpop.f32.mrf.mxu0
      %v1514 = vadd.f32 %v1456, %v1513
      %1515 = vdwg.mxu0
      %v1516 = vtanh.pop %v1488
      %v1517 = vtanh.pop %v1511
      %v1518 = vtanh.pop %v1491
      %v1519 = vtanh.pop %v1514
      %1522 = vrot.lane.b32.xlu0 %v1517, 16
      %v1523 = vpop.permute.xlu0 %1522
      %1524 = vrot.lane.b32.xlu0 %v1519, 16
      %v1525 = vpop.permute.xlu0 %1524
      %1530 = vrot.lane.b32.xlu0 %v1516, 16
      %v1531 = vpop.permute.xlu0 %1530
      %1532 = vrot.lane.b32.xlu0 %v1518, 16
      %v1533 = vpop.permute.xlu0 %1532
      %v1534 = vsel %vm424, %v1531, %v1523
      %v1535 = vsel %vm424, %v1533, %v1525
      %v1538 = vsel %vm424, %v1523, %v1531
      %v1539 = vsel %vm424, %v1525, %v1533
      %1542 = vrot.lane.b32.xlu0 %v1538, 113
      %v1543 = vpop.permute.xlu0 %1542
      %1544 = vrot.lane.b32.xlu0 %v1534, 113
      %v1545 = vpop.permute.xlu0 %1544
      %1546 = vrot.lane.b32.xlu0 %v1539, 113
      %v1547 = vpop.permute.xlu0 %1546
      %1548 = vrot.lane.b32.xlu0 %v1535, 113
      %v1549 = vpop.permute.xlu0 %1548
      %v1550 = vsel %vm433, %v1543, %v1545
      %v1551 = vsel %vm433, %v1547, %v1549
      %v1558 = vsel %vm433, %v1545, %v1543
      %v1559 = vsel %vm433, %v1549, %v1547
      %1560 = vrot.lane.b32.xlu0 %v1534, 1
      %v1561 = vpop.permute.xlu0 %1560
      %1562 = vrot.lane.b32.xlu0 %v1535, 1
      %v1563 = vpop.permute.xlu0 %1562
      %1566 = vrot.lane.b32.xlu0 %v1538, 1
      %v1567 = vpop.permute.xlu0 %1566
      %1568 = vrot.lane.b32.xlu0 %v1539, 1
      %v1569 = vpop.permute.xlu0 %1568
      %v1570 = vsel %vm444, %v1567, %v1561
      %v1571 = vsel %vm444, %v1569, %v1563
      %v1576 = vsel %vm444, %v1561, %v1567
      %v1577 = vsel %vm444, %v1563, %v1569
      %v1578 = vsel %vm414, %v1550, %v1576
      %v1579 = vsel %vm415, %v1558, %v1570
      %v1580 = vsel %vm414, %v1551, %v1577
      %v1581 = vsel %vm415, %v1559, %v1571
      %1582 = vrot.lane.b32.xlu0 %v1534, 15
      %v1583 = vpop.permute.xlu0 %1582
      %1584 = vrot.lane.b32.xlu0 %v1535, 15
      %v1585 = vpop.permute.xlu0 %1584
      %1588 = vrot.lane.b32.xlu0 %v1538, 15
      %v1589 = vpop.permute.xlu0 %1588
      %1590 = vrot.lane.b32.xlu0 %v1539, 15
      %v1591 = vpop.permute.xlu0 %1590
      %v1592 = vsel %vm456, %v1589, %v1583
      %v1593 = vsel %vm456, %v1591, %v1585
      %v1598 = vsel %vm456, %v1583, %v1589
      %v1599 = vsel %vm456, %v1585, %v1591
      %1600 = vrot.lane.b32.xlu0 %v1538, 127
      %v1601 = vpop.permute.xlu0 %1600
      %1602 = vrot.lane.b32.xlu0 %v1534, 127
      %v1603 = vpop.permute.xlu0 %1602
      %1604 = vrot.lane.b32.xlu0 %v1539, 127
      %v1605 = vpop.permute.xlu0 %1604
      %1606 = vrot.lane.b32.xlu0 %v1535, 127
      %v1607 = vpop.permute.xlu0 %1606
      %v1608 = vsel %vm465, %v1601, %v1603
      %v1609 = vsel %vm465, %v1605, %v1607
      %v1616 = vsel %vm465, %v1603, %v1601
      %v1617 = vsel %vm465, %v1607, %v1605
      %v1618 = vsel %vm412, %v1598, %v1608
      %v1619 = vsel %vm413, %v1592, %v1616
      %v1620 = vsel %vm412, %v1599, %v1609
      %v1621 = vsel %vm413, %v1593, %v1617
      %1622 = vrot.lane.b32.xlu0 %v1516, 113
      %v1623 = vpop.permute.xlu0 %1622
      %1624 = vrot.lane.b32.xlu0 %v1517, 113
      %v1625 = vpop.permute.xlu0 %1624
      %1626 = vrot.lane.b32.xlu0 %v1518, 113
      %v1627 = vpop.permute.xlu0 %1626
      %1628 = vrot.lane.b32.xlu0 %v1519, 113
      %v1629 = vpop.permute.xlu0 %1628
      %v1630 = vsel %vm433, %v1623, %v1625
      %v1631 = vsel %vm433, %v1627, %v1629
      %v1638 = vsel %vm433, %v1625, %v1623
      %v1639 = vsel %vm433, %v1629, %v1627
      %1640 = vrot.lane.b32.xlu0 %v1517, 1
      %v1641 = vpop.permute.xlu0 %1640
      %1642 = vrot.lane.b32.xlu0 %v1519, 1
      %v1643 = vpop.permute.xlu0 %1642
      %1646 = vrot.lane.b32.xlu0 %v1516, 1
      %v1647 = vpop.permute.xlu0 %1646
      %1648 = vrot.lane.b32.xlu0 %v1518, 1
      %v1649 = vpop.permute.xlu0 %1648
      %v1650 = vsel %vm444, %v1647, %v1641
      %v1651 = vsel %vm444, %v1649, %v1643
      %v1656 = vsel %vm444, %v1641, %v1647
      %v1657 = vsel %vm444, %v1643, %v1649
      %v1658 = vsel %vm414, %v1630, %v1656
      %v1659 = vsel %vm415, %v1638, %v1650
      %v1660 = vsel %vm414, %v1631, %v1657
      %v1661 = vsel %vm415, %v1639, %v1651
      %1662 = vrot.lane.b32.xlu0 %v1517, 15
      %v1663 = vpop.permute.xlu0 %1662
      %1664 = vrot.lane.b32.xlu0 %v1519, 15
      %v1665 = vpop.permute.xlu0 %1664
      %1668 = vrot.lane.b32.xlu0 %v1516, 15
      %v1669 = vpop.permute.xlu0 %1668
      %1670 = vrot.lane.b32.xlu0 %v1518, 15
      %v1671 = vpop.permute.xlu0 %1670
      %v1672 = vsel %vm456, %v1669, %v1663
      %v1673 = vsel %vm456, %v1671, %v1665
      %v1678 = vsel %vm456, %v1663, %v1669
      %v1679 = vsel %vm456, %v1665, %v1671
      %1680 = vrot.lane.b32.xlu0 %v1516, 127
      %v1681 = vpop.permute.xlu0 %1680
      %1682 = vrot.lane.b32.xlu0 %v1517, 127
      %v1683 = vpop.permute.xlu0 %1682
      %1684 = vrot.lane.b32.xlu0 %v1518, 127
      %v1685 = vpop.permute.xlu0 %1684
      %1686 = vrot.lane.b32.xlu0 %v1519, 127
      %v1687 = vpop.permute.xlu0 %1686
      %v1688 = vsel %vm465, %v1681, %v1683
      %v1689 = vsel %vm465, %v1685, %v1687
      %v1696 = vsel %vm465, %v1683, %v1681
      %v1697 = vsel %vm465, %v1687, %v1685
      %v1698 = vsel %vm412, %v1678, %v1688
      %v1699 = vsel %vm413, %v1672, %v1696
      %v1700 = vsel %vm412, %v1679, %v1689
      %v1701 = vsel %vm413, %v1673, %v1697
      %1702 = vrot.lane.b32.xlu0 %v1516, 112
      %v1703 = vpop.permute.xlu0 %1702
      %1704 = vrot.lane.b32.xlu0 %v1517, 112
      %v1705 = vpop.permute.xlu0 %1704
      %1706 = vrot.lane.b32.xlu0 %v1518, 112
      %v1707 = vpop.permute.xlu0 %1706
      %1708 = vrot.lane.b32.xlu0 %v1519, 112
      %v1709 = vpop.permute.xlu0 %1708
      %v1710 = vsel %vm517, %v1703, %v1705
      %v1711 = vsel %vm517, %v1707, %v1709
      %v1716 = vsel %vm517, %v1705, %v1703
      %v1717 = vsel %vm517, %v1709, %v1707
      %1720 = vrot.lane.b32.xlu0 %v1710, 113
      %v1721 = vpop.permute.xlu0 %1720
      %1722 = vrot.lane.b32.xlu0 %v1716, 113
      %v1723 = vpop.permute.xlu0 %1722
      %1724 = vrot.lane.b32.xlu0 %v1711, 113
      %v1725 = vpop.permute.xlu0 %1724
      %1726 = vrot.lane.b32.xlu0 %v1717, 113
      %v1727 = vpop.permute.xlu0 %1726
      %v1728 = vsel %vm433, %v1721, %v1723
      %v1729 = vsel %vm433, %v1725, %v1727
      %v1736 = vsel %vm433, %v1723, %v1721
      %v1737 = vsel %vm433, %v1727, %v1725
      %1738 = vrot.lane.b32.xlu0 %v1716, 1
      %v1739 = vpop.permute.xlu0 %1738
      %1740 = vrot.lane.b32.xlu0 %v1717, 1
      %v1741 = vpop.permute.xlu0 %1740
      %1744 = vrot.lane.b32.xlu0 %v1710, 1
      %v1745 = vpop.permute.xlu0 %1744
      %1746 = vrot.lane.b32.xlu0 %v1711, 1
      %v1747 = vpop.permute.xlu0 %1746
      %v1748 = vsel %vm444, %v1745, %v1739
      %v1749 = vsel %vm444, %v1747, %v1741
      %v1754 = vsel %vm444, %v1739, %v1745
      %v1755 = vsel %vm444, %v1741, %v1747
      %v1756 = vsel %vm414, %v1728, %v1754
      %v1757 = vsel %vm415, %v1736, %v1748
      %v1758 = vsel %vm414, %v1729, %v1755
      %v1759 = vsel %vm415, %v1737, %v1749
      %1760 = vrot.lane.b32.xlu0 %v1716, 15
      %v1761 = vpop.permute.xlu0 %1760
      %1762 = vrot.lane.b32.xlu0 %v1717, 15
      %v1763 = vpop.permute.xlu0 %1762
      %1766 = vrot.lane.b32.xlu0 %v1710, 15
      %v1767 = vpop.permute.xlu0 %1766
      %1768 = vrot.lane.b32.xlu0 %v1711, 15
      %v1769 = vpop.permute.xlu0 %1768
      %v1770 = vsel %vm456, %v1767, %v1761
      %v1771 = vsel %vm456, %v1769, %v1763
      %v1776 = vsel %vm456, %v1761, %v1767
      %v1777 = vsel %vm456, %v1763, %v1769
      %1778 = vrot.lane.b32.xlu0 %v1710, 127
      %v1779 = vpop.permute.xlu0 %1778
      %1780 = vrot.lane.b32.xlu0 %v1716, 127
      %v1781 = vpop.permute.xlu0 %1780
      %1782 = vrot.lane.b32.xlu0 %v1711, 127
      %v1783 = vpop.permute.xlu0 %1782
      %1784 = vrot.lane.b32.xlu0 %v1717, 127
      %v1785 = vpop.permute.xlu0 %1784
      %v1786 = vsel %vm465, %v1779, %v1781
      %v1787 = vsel %vm465, %v1783, %v1785
      %v1794 = vsel %vm465, %v1781, %v1779
      %v1795 = vsel %vm465, %v1785, %v1783
      %v1796 = vsel %vm412, %v1776, %v1786
      %v1797 = vsel %vm413, %v1770, %v1794
      %v1798 = vsel %vm412, %v1777, %v1787
      %v1799 = vsel %vm413, %v1771, %v1795
      %v1800 = vrot.slane %v1538, 4
      %v1801 = vrot.slane %v1534, 4
      %v1802 = vrot.slane %v1539, 4
      %v1803 = vsel %vm606, %v1800, %v1802
      %v1804 = vrot.slane %v1535, 4
      %v1805 = vsel %vm606, %v1801, %v1804
      %v1814 = vrot.slane %v1658, 4
      %v1815 = vrot.slane %v1659, 4
      %v1816 = vrot.slane %v1660, 4
      %v1817 = vsel %vm606, %v1814, %v1816
      %v1818 = vrot.slane %v1661, 4
      %v1819 = vsel %vm606, %v1815, %v1818
      %v1828 = vrot.slane %v1698, 4
      %v1829 = vrot.slane %v1699, 4
      %v1830 = vrot.slane %v1700, 4
      %v1831 = vsel %vm606, %v1828, %v1830
      %v1832 = vrot.slane %v1701, 4
      %v1833 = vsel %vm606, %v1829, %v1832
      %v1838 = vrot.slane %v1710, 4
      %v1839 = vrot.slane %v1716, 4
      %v1840 = vrot.slane %v1711, 4
      %v1841 = vsel %vm606, %v1838, %v1840
      %v1842 = vrot.slane %v1717, 4
      %v1843 = vsel %vm606, %v1839, %v1842
      %v1848 = vsel %vm606, %v1580, %v1800
      %v1849 = vsel %vm606, %v1581, %v1801
      %v1850 = vsel %vm606, %v1620, %v1814
      %v1851 = vsel %vm606, %v1621, %v1815
      %v1852 = vsel %vm606, %v1518, %v1828
      %v1853 = vsel %vm606, %v1519, %v1829
      %v1854 = vsel %vm606, %v1758, %v1838
      %v1855 = vsel %vm606, %v1759, %v1839
      %v1856 = vld [vmem:[%s7] sm:$0xff]
      %v1857 = vld [vmem:[%s7 + $0x8] sm:$0xf]
      %v1858 = vld [vmem:[%s8] sm:$0xff]
      %v1859 = vld [vmem:[%s8 + $0x8] sm:$0xf]
      %1861 = vset.pattern.permute.xlu0 0
      %1862 = vperm.xlu0 %1861, %v1858
      %v1863 = vpop.permute.xlu0 %1862
      %1866 = vset.pattern.permute.xlu0 0
      %1867 = vperm.xlu0 %1866, %v1859
      %v1868 = vpop.permute.xlu0 %1867
      %v1871 = vsel %vm1045, %v1856, 0
      %v1874 = vsel %vm1045, %v1857, 0
      %v1877 = vsel %vm606, %v1798, 0
      %v1880 = vsel %vm606, %v1799, 0
      %1882 = vmatpush.msra.mxu0 0.0
      %1883 = vmatpush.msra.mxu0 0.0
      %1884 = vmatpush.msra.mxu0 %v1877
      %1885 = vmatpush.msra.mxu0 %v1796
      %1886 = vmatpush.msra.mxu0 %v1841
      %1887 = vmatpush.msra.mxu0 %v1854
      %1888 = vmatpush.msra.mxu0 %v1756
      %1889 = vmatpush.msra.mxu0 %v1831
      %1890 = vmatpush.msra.mxu0 %v1852
      %1891 = vmatpush.msra.mxu0 %v1516
      %1892 = vmatpush.msra.mxu0 %v1817
      %1893 = vmatpush.msra.mxu0 %v1850
      %1894 = vmatpush.msra.mxu0 %v1618
      %1895 = vmatpush.msra.mxu0 %v1803
      %1896 = vmatpush.msra.mxu0 %v1848
      %1897 = vmatpush.msra.mxu0 %v1578
      %1898 = vmatmul.f32.gmra.mxu0 %v1871
      %v1899 = vpop.f32.mrf.mxu0
      %v1900 = vadd.f32 %v1863, %v1899
      %1901 = vmatmul.f32.gmra.mxu0 %v1874
      %v1902 = vpop.f32.mrf.mxu0
      %v1903 = vadd.f32 %v1868, %v1902
      %1904 = vdwg.mxu0
      %1905 = vmatpush.msra.mxu0 0.0
      %1906 = vmatpush.msra.mxu0 0.0
      %1907 = vmatpush.msra.mxu0 %v1880
      %1908 = vmatpush.msra.mxu0 %v1797
      %1909 = vmatpush.msra.mxu0 %v1843
      %1910 = vmatpush.msra.mxu0 %v1855
      %1911 = vmatpush.msra.mxu0 %v1757
      %1912 = vmatpush.msra.mxu0 %v1833
      %1913 = vmatpush.msra.mxu0 %v1853
      %1914 = vmatpush.msra.mxu0 %v1517
      %1915 = vmatpush.msra.mxu0 %v1819
      %1916 = vmatpush.msra.mxu0 %v1851
      %1917 = vmatpush.msra.mxu0 %v1619
      %1918 = vmatpush.msra.mxu0 %v1805
      %1919 = vmatpush.msra.mxu0 %v1849
      %1920 = vmatpush.msra.mxu0 %v1579
      %1921 = vmatmul.f32.gmra.mxu0 %v1871
      %v1922 = vpop.f32.mrf.mxu0
      %v1923 = vadd.f32 %v1863, %v1922
      %1924 = vmatmul.f32.gmra.mxu0 %v1874
      %v1925 = vpop.f32.mrf.mxu0
      %v1926 = vadd.f32 %v1868, %v1925
      %1927 = vdwg.mxu0
      %v1928 = vtanh.pop %v1900
      %v1929 = vtanh.pop %v1923
      %v1930 = vtanh.pop %v1903
      %v1931 = vtanh.pop %v1926
      %v1932 = vld [vmem:[%s9] sm:$0x1]
      %v1933 = vld [vmem:[#allocation2] sm:$0x1]
      %1935 = vset.pattern.permute.xlu0 0
      %1936 = vperm.xlu0 %1935, %v1933
      %v1937 = vpop.permute.xlu0 %1936
      %v1939 = vperm.slane %v1937, 0
      %vm1940 = vcmask 97280
      %v1942 = vsel %vm1940, %v1932, 0
      %v1945 = vsel %vm606, %v1930, 0
      %v1948 = vsel %vm606, %v1931, 0
      %1950 = vmatpush.msra.mxu0 0.0
      %1951 = vmatpush.msra.mxu0 0.0
      %1952 = vmatpush.msra.mxu0 0.0
      %1953 = vmatpush.msra.mxu0 0.0
      %1954 = vmatpush.msra.mxu0 0.0
      %1955 = vmatpush.msra.mxu0 0.0
      %1956 = vmatpush.msra.mxu0 0.0
      %1957 = vmatpush.msra.mxu0 0.0
      %1958 = vmatpush.msra.mxu0 0.0
      %1959 = vmatpush.msra.mxu0 0.0
      %1960 = vmatpush.msra.mxu0 0.0
      %1961 = vmatpush.msra.mxu0 0.0
      %1962 = vmatpush.msra.mxu0 0.0
      %1963 = vmatpush.msra.mxu0 0.0
      %1964 = vmatpush.msra.mxu0 %v1945
      %1965 = vmatpush.msra.mxu0 %v1928
      %1966 = vmatmul.f32.gmra.mxu0 %v1942
      %v1967 = vpop.f32.mrf.mxu0
      %v1968 = vadd.f32 %v1939, %v1967
      %1969 = vdwg.mxu0
      %1970 = vmatpush.msra.mxu0 0.0
      %1971 = vmatpush.msra.mxu0 0.0
      %1972 = vmatpush.msra.mxu0 0.0
      %1973 = vmatpush.msra.mxu0 0.0
      %1974 = vmatpush.msra.mxu0 0.0
      %1975 = vmatpush.msra.mxu0 0.0
      %1976 = vmatpush.msra.mxu0 0.0
      %1977 = vmatpush.msra.mxu0 0.0
      %1978 = vmatpush.msra.mxu0 0.0
      %1979 = vmatpush.msra.mxu0 0.0
      %1980 = vmatpush.msra.mxu0 0.0
      %1981 = vmatpush.msra.mxu0 0.0
      %1982 = vmatpush.msra.mxu0 0.0
      %1983 = vmatpush.msra.mxu0 0.0
      %1984 = vmatpush.msra.mxu0 %v1948
      %1985 = vmatpush.msra.mxu0 %v1929
      %1986 = vmatmul.f32.gmra.mxu0 %v1942
      %v1987 = vpop.f32.mrf.mxu0
      %v1988 = vadd.f32 %v1939, %v1987
      %1989 = vdwg.mxu0
      %v1992 = vrot.slane %v1988, 7
      %v1993 = vsel %vm597, %v1968, %v1992
      %v1995 = vlaneseq
      %vm1996 = vcmp.ge.s32.totalorder %v1995, 0
      %vm1997 = vcmp.lt.s32.totalorder %v1995, 256
      %vm1998 = vmand %vm1996, %vm1997
      %1999 = vst.msk [vmem:[%s383] sm:$0x3] %vm1998, %v1993
      %p2000 = scmp.lt.s32.totalorder %s24, 1
      %s2001 = scalar_select %p2000, %s24, 1
      %s2002 = smul.addr %s2001, 2
      %s2003 = scalar_lea.vmem %s11, %s2002
      // Predicated region
      $region65: #{net_forward.1} parent=63 // pred_check
        %p2004 = pneg %p278
      $region66: #{net_forward.1} parent=63 // pred_check_branch
        %2006 = sbr.rel (%p2004) target = $region68
      $region67: #{net_forward.1} parent=63 // pred_region
        _
      $region68: #{net_forward.1} parent=63 // pred_fallthru
        _
    $region64: #{net_forward.1} parent=5 // pred_fallthru
      _
    %p2007 = scmp.le.s32.totalorder 2, %s19
    // Predicated region
    $region69: #{net_forward.1} parent=5 // pred_check
      %p2008 = pneg %p2007
    $region70: #{net_forward.1} parent=5 // pred_check_branch
      %2010 = sbr.rel (%p2008) target = $region72
    $region71: #{net_forward.1} parent=5 // pred_region
      %s2011 = ssub.s32 %s19, 2
      // Predicated region
      $region73: #{net_forward.1} parent=71 // pred_check
        %p2012 = pneg %p284
      $region74: #{net_forward.1} parent=71 // pred_check_branch
        %2014 = sbr.rel (%p2012) target = $region76
      $region75: #{net_forward.1} parent=71 // pred_region
        %p2015 = scmp.lt.s32.totalorder %s25, 1
        %s2016 = scalar_select %p2015, %s25, 1
        %s2017 = smul.addr %s2016, 2
        %s2018 = scalar_lea.vmem %s11, %s2017
      $region76: #{net_forward.1} parent=71 // pred_fallthru
        _
    $region72: #{net_forward.1} parent=5 // pred_fallthru
      _
  $region6: #{net_forward.1} parent=0 // loop_footer
    %s23 = sadd.s32 1, %s19
  $region7: #{net_forward.1} parent=0 // loop_footer_branch
    %18 = sbr.rel target = $region3
  $region8: #{net_forward.1} parent=0 // loop_exit
    _

</llo_original>
